<compile_context>
chip_gen: v7x
topology: tpu7x:2x2x1
jax: 0.10.0
libtpu: 0.0.40
codegen_flags: <defaults>
</compile_context>

<pallas_src>
import functools

import jax
import jax.numpy as jnp
from jax.experimental import pallas as pl
from jax.experimental.pallas import tpu as pltpu


def _round_up(x, m):
    return ((x + m - 1) // m) * m


# ---------------------------------------------------------------------------
# In-kernel direct conv: gather KH*KW lane-shifted taps into a patch matrix
# ---------------------------------------------------------------------------
def _build_patch_matrix(x_ref, p_ref, *, KH, KW, Wp, C, T, HALO, CKK, CKK_pad):
    """x_ref: [C, LOUT_pad + HALO] folded padded plane (bf16/f32, whole array).
    p_ref:  [CKK_pad, T] f32 VMEM scratch; rows ordered (kh, kw, c).
    Returns the assembled f32 patch matrix for the current lane tile."""
    j0 = pl.multiple_of(pl.program_id(0) * T, 128)
    xw = x_ref[:, pl.ds(j0, T + HALO)].astype(jnp.float32)       # [C, T + HALO]
    if CKK_pad > CKK:   # keep pad rows zero (never NaN) so zero weight cols stay inert
        p_ref[CKK:CKK_pad, :] = jnp.zeros((CKK_pad - CKK, T), jnp.float32)
    t = 0
    for kh in range(KH):
        for kw in range(KW):
            off = kh * Wp + kw                                    # static lane shift
            p_ref[t * C:(t + 1) * C, :] = xw[:, off:off + T]
            t += 1
    return p_ref[...]


# ---------------------------------------------------------------------------
# Kernels
# ---------------------------------------------------------------------------
def _bayes_kernel(x_ref, wm_ref, bm_ref, ws_ref, bs_ref, nz_ref, out_ref, kl_ref,
                  p_ref, *, KH, KW, Wp, C, T, HALO, CKK, CKK_pad):
    """switch=True: conv_mean(x), conv_sigma(x*x), sigmoid, sqrt-noise mix,
    fused ReLU and per-lane KL partial sums."""
    p = _build_patch_matrix(x_ref, p_ref, KH=KH, KW=KW, Wp=Wp, C=C, T=T,
                            HALO=HALO, CKK=CKK, CKK_pad=CKK_pad)
    mdt = wm_ref.dtype
    zm = jnp.dot(wm_ref[...], p.astype(mdt),
                 preferred_element_type=jnp.float32) + bm_ref[...]
    # sigma conv consumes x*x: square in f32, cast the product for the MXU.
    zs = jnp.dot(ws_ref[...], (p * p).astype(mdt),
                 preferred_element_type=jnp.float32) + bs_ref[...]

    x_mean = jax.nn.sigmoid(zm)
    # One exp serves both sigmoid(zs) and log(sigmoid(zs)); stable for any zs.
    e = jnp.exp(-jnp.abs(zs))
    inv = 1.0 / (1.0 + e)
    x_sigma = jnp.where(zs >= 0.0, inv, e * inv)
    log_sigma = jnp.minimum(zs, 0.0) - jnp.log1p(e)               # log(sigmoid(zs))

    noise = nz_ref[...].astype(jnp.float32)
    out = x_mean + jnp.sqrt(x_sigma) * noise
    out_ref[...] = jnp.maximum(out, 0.0).astype(out_ref.dtype)    # fused ReLU

    kl = x_sigma + x_mean * x_mean - log_sigma - 1.0               # [F, T]
    kl_ref[...] = jnp.sum(kl, axis=0, keepdims=True)               # per-lane partials


def _mean_relu_kernel(x_ref, wm_ref, bm_ref, out_ref, p_ref,
                      *, KH, KW, Wp, C, T, HALO, CKK, CKK_pad):
    """switch=False: plain conv_mean followed by fused ReLU."""
    p = _build_patch_matrix(x_ref, p_ref, KH=KH, KW=KW, Wp=Wp, C=C, T=T,
                            HALO=HALO, CKK=CKK, CKK_pad=CKK_pad)
    zm = jnp.dot(wm_ref[...], p.astype(wm_ref.dtype),
                 preferred_element_type=jnp.float32) + bm_ref[...]
    out_ref[...] = jnp.maximum(zm, 0.0).astype(out_ref.dtype)


# ---------------------------------------------------------------------------
# Wrapper-side layout helpers
# ---------------------------------------------------------------------------
def _unfold(flat, B, SEG, Ho, Wo, Wp):
    """[N, n_tiles*T] folded lane layout -> [B, N, Ho, Wo] (drop pad columns)."""
    parts = [flat[:, b * SEG: b * SEG + Ho * Wp].reshape(-1, Ho, Wp)[:, :, :Wo]
             for b in range(B)]
    return jnp.stack(parts, axis=0)


def _maxpool2d_with_indices(x, k, s):
    """torch.nn.MaxPool2d(kernel_size=k, stride=s, return_indices=True) equivalent."""
    # TODO(synk): pooling + index extraction stays in plain jnp/XLA; a fused lane-dense
    # Pallas version would need cross-lane window compaction (gather).
    B, F, H, W = x.shape
    Ho = (H - k) // s + 1
    Wo = (W - k) // s + 1
    wins = jnp.stack(
        [x[:, :, kh:kh + s * (Ho - 1) + 1:s, kw:kw + s * (Wo - 1) + 1:s]
         for kh in range(k) for kw in range(k)], axis=-1)          # [B,F,Ho,Wo,k*k]
    pool = jnp.max(wins, axis=-1)
    arg = jnp.argmax(wins, axis=-1)
    kh_i = arg // k
    kw_i = arg % k
    row = jnp.arange(Ho).reshape(1, 1, Ho, 1) * s + kh_i
    col = jnp.arange(Wo).reshape(1, 1, 1, Wo) * s + kw_i
    ind = (row * W + col).astype(jnp.int32)                        # flat index in HxW plane
    return pool, ind


# ---------------------------------------------------------------------------
# Forward pass (EncoderBayesianBlock.forward)
# ---------------------------------------------------------------------------
def encoder_bayesian_block_forward(weights, cfg, x, key=None, pool_required=True,
                                   switch=False, tile_s_max=2048,
                                   compute_dtype=jnp.bfloat16):
    """Replicates EncoderBayesianBlock.forward.  Returns (pool, out, ind, kl_loss)."""
    KH, KW = cfg["kernel_h"], cfg["kernel_w"]
    if cfg["stride_conv"] != 1:
        # TODO(synk): stride > 1 breaks the constant-lane-shift direct conv; needs an
        # im2col / row-gather path.
        raise NotImplementedError("only stride_conv == 1 is supported")
    Fn = cfg["num_filters"]
    B, C, H, W = x.shape
    ph, pw = (KH - 1) // 2, (KW - 1) // 2
    Hp, Wp = H + 2 * ph, W + 2 * pw
    Ho, Wo = Hp - KH + 1, Wp - KW + 1
    KK = KH * KW
    CKK = KK * C
    CKK_pad = _round_up(CKK, 8)

    # Folded flat layout: batch on the lane axis, one padded plane per SEG lanes.
    # TODO(synk): for planes too large to keep whole in VMEM, switch to halo-tiled
    # manual DMA (pl.ANY + make_async_copy) instead of the whole-plane block.
    SEG = _round_up(Hp * Wp, 128)
    LOUT = B * SEG
    max_off = (KH - 1) * Wp + (KW - 1)
    HALO = _round_up(max(max_off, 1), 128)

    # Balanced lane tiles under a VMEM budget; keep >= 2 grid steps (megacore/v7x).
    isz = jnp.dtype(compute_dtype).itemsize
    per_lane = 16 * CKK_pad + 12 * Fn + 8 * C + 32
    tile_cap = max(128, min(tile_s_max, ((8 << 20) // per_lane) // 128 * 128))
    n_tiles = max(2 if LOUT >= 256 else 1, pl.cdiv(LOUT, tile_cap))
    T = _round_up(pl.cdiv(LOUT, n_tiles), 128)
    LOUT_pad = n_tiles * T

    xp = jnp.pad(x.astype(jnp.float32), ((0, 0), (0, 0), (ph, ph), (pw, pw)))
    xflat = jnp.pad(xp.reshape(B, C, Hp * Wp), ((0, 0), (0, 0), (0, SEG - Hp * Wp)))
    xall = jnp.transpose(xflat, (1, 0, 2)).reshape(C, LOUT)
    xall = jnp.pad(xall, ((0, 0), (0, LOUT_pad - LOUT + HALO))).astype(compute_dtype)

    def _reorder(w):
        # columns ordered (kh, kw, c) to match the in-kernel patch rows
        w2 = jnp.transpose(w.astype(jnp.float32), (0, 2, 3, 1)).reshape(Fn, CKK)
        return jnp.pad(w2, ((0, 0), (0, CKK_pad - CKK))).astype(compute_dtype)

    wm = _reorder(weights["wm"])
    ws = _reorder(weights["ws"])
    bm = weights["bm"].reshape(Fn, 1).astype(jnp.float32)
    bs = weights["bs"].reshape(Fn, 1).astype(jnp.float32)

    x_spec = pl.BlockSpec((C, LOUT_pad + HALO), lambda i: (0, 0))   # whole plane, DMA'd once
    w_spec = pl.BlockSpec((Fn, CKK_pad), lambda i: (0, 0))
    b_spec = pl.BlockSpec((Fn, 1), lambda i: (0, 0))
    o_spec = pl.BlockSpec((Fn, T), lambda i: (0, i))
    kl_spec = pl.BlockSpec((1, T), lambda i: (0, i))

    # Generation-aware VMEM sizing: only raise the scoped limit when needed.
    vmem_est = (2 * C * (LOUT_pad + HALO) * isz
                + 2 * Fn * (CKK_pad * isz + 4)
                + 2 * T * (Fn * isz + Fn * 4 + 4)
                + CKK_pad * T * 4
                + 4 * (C * (T + HALO) + 3 * CKK_pad * T + 8 * Fn * T))
    vmem_limit = None if vmem_est <= (12 << 20) else int(min(vmem_est * 3 // 2, 48 << 20))
    cparams = pltpu.CompilerParams(dimension_semantics=("parallel",),
                                   vmem_limit_bytes=vmem_limit)
    statics = dict(KH=KH, KW=KW, Wp=Wp, C=C, T=T, HALO=HALO, CKK=CKK, CKK_pad=CKK_pad)
    scratch = [pltpu.VMEM((CKK_pad, T), jnp.float32)]

    if switch:
        if key is None:
            raise ValueError("switch=True requires a PRNG key")
        # N(0,1) noise streamed in bf16, already in the kernel's lane-dense layout.
        noise = jax.random.normal(key, (Fn, LOUT_pad), dtype=compute_dtype)
        out_flat, kl_cols = pl.pallas_call(
            functools.partial(_bayes_kernel, **statics),
            out_shape=(jax.ShapeDtypeStruct((Fn, LOUT_pad), jnp.float32),
                       jax.ShapeDtypeStruct((1, LOUT_pad), jnp.float32)),
            grid=(n_tiles,),
            in_specs=[x_spec, w_spec, b_spec, w_spec, b_spec, o_spec],
            out_specs=(o_spec, kl_spec),
            scratch_shapes=scratch,
            compiler_params=cparams,
        )(xall, wm, bm, ws, bs, noise)
        kl_map = _unfold(kl_cols, B, SEG, Ho, Wo, Wp)               # [B, 1, Ho, Wo]
        kl_loss = jnp.sum(kl_map) / jnp.float32(B * Fn * Ho * Wo)
    else:
        out_flat = pl.pallas_call(
            functools.partial(_mean_relu_kernel, **statics),
            out_shape=jax.ShapeDtypeStruct((Fn, LOUT_pad), jnp.float32),
            grid=(n_tiles,),
            in_specs=[x_spec, w_spec, b_spec],
            out_specs=o_spec,
            scratch_shapes=scratch,
            compiler_params=cparams,
        )(xall, wm, bm)
        kl_loss = None

    out = _unfold(out_flat, B, SEG, Ho, Wo, Wp)                     # [B, F, Ho, Wo]

    if pool_required:
        pool, ind = _maxpool2d_with_indices(out, cfg["pool"], cfg["stride_pool"])
    else:
        pool, ind = None, None
    return pool, out, ind, kl_loss


# ---------------------------------------------------------------------------
# Deterministic parameter init (PyTorch Conv2d default: U(-k, k), k=1/sqrt(fan_in))
# ---------------------------------------------------------------------------
def init_params(key, cfg):
    C, Fn = cfg["num_channels"], cfg["num_filters"]
    KH, KW = cfg["kernel_h"], cfg["kernel_w"]
    k = 1.0 / jnp.sqrt(jnp.float32(C * KH * KW))
    ks = jax.random.split(key, 4)
    return {
        "wm": jax.random.uniform(ks[0], (Fn, C, KH, KW), jnp.float32, -k, k),
        "bm": jax.random.uniform(ks[1], (Fn,), jnp.float32, -k, k),
        "ws": jax.random.uniform(ks[2], (Fn, C, KH, KW), jnp.float32, -k, k),
        "bs": jax.random.uniform(ks[3], (Fn,), jnp.float32, -k, k),
    }


if __name__ == "__main__":
    root = jax.random.PRNGKey(0)
    k_param, k_x, k_noise = jax.random.split(root, 3)

    cfg = dict(num_channels=4, num_filters=8, kernel_h=5, kernel_w=5,
               stride_conv=1, pool=2, stride_pool=2)
    weights = init_params(k_param, cfg)

    B, C, H, W = 2, 4, 16, 16
    x = jax.random.normal(k_x, (B, C, H, W), dtype=jnp.float32)

    # switch=True path: Bayesian sampling + ReLU + MaxPool(indices) + KL loss.
    pool, out, ind, kl = encoder_bayesian_block_forward(
        weights, cfg, x, key=k_noise, pool_required=True, switch=True)
    jax.block_until_ready((pool, out, ind, kl))
    Fn = cfg["num_filters"]
    assert out.shape == (B, Fn, H, W)
    assert pool.shape == (B, Fn, H // 2, W // 2)
    assert ind.shape == pool.shape
    assert kl.shape == ()
    assert bool(jnp.isfinite(kl))
    assert bool(jnp.all(jnp.isfinite(out)))
    assert bool(jnp.all(out >= 0.0))
    assert int(jnp.min(ind)) >= 0 and int(jnp.max(ind)) < H * W

    # f32 reference convs (KL is noise-independent; switch=False is deterministic).
    ph, pw = (cfg["kernel_h"] - 1) // 2, (cfg["kernel_w"] - 1) // 2
    pad = ((ph, ph), (pw, pw))
    dn = ("NCHW", "OIHW", "NCHW")
    zm_ref = jax.lax.conv_general_dilated(x, weights["wm"], (1, 1), pad,
                                          dimension_numbers=dn) + weights["bm"].reshape(1, -1, 1, 1)
    zs_ref = jax.lax.conv_general_dilated(x * x, weights["ws"], (1, 1), pad,
                                          dimension_numbers=dn) + weights["bs"].reshape(1, -1, 1, 1)
    sm, ss = jax.nn.sigmoid(zm_ref), jax.nn.sigmoid(zs_ref)
    kl_ref = jnp.mean(ss + sm ** 2 - jnp.log(ss) - 1.0)
    # bf16 operand streams -> relaxed tolerance vs the f32 reference.
    assert jnp.allclose(kl, kl_ref, rtol=1e-2, atol=2e-3), (float(kl), float(kl_ref))

    # switch=False path: plain conv_mean -> ReLU, no pooling requested.
    pool2, out2, ind2, kl2 = encoder_bayesian_block_forward(
        weights, cfg, x, key=None, pool_required=False, switch=False)
    jax.block_until_ready(out2)
    assert out2.shape == (B, Fn, H, W)
    assert pool2 is None and ind2 is None and kl2 is None
    out2_ref = jnp.maximum(zm_ref, 0.0)
    assert jnp.allclose(out2, out2_ref, rtol=5e-2, atol=5e-2), \
        float(jnp.max(jnp.abs(out2 - out2_ref)))

    print("KERNEL_OK")
</pallas_src>

<mosaic_0001>
module attributes {stable_mosaic.version = 11 : i64} {
  func.func @_bayes_kernel(%arg0: i32, %arg1: memref<4x1152xbf16, #tpu.memory_space<vmem>>, %arg2: memref<8x104xbf16, #tpu.memory_space<vmem>>, %arg3: memref<8x1xf32, #tpu.memory_space<vmem>>, %arg4: memref<8x104xbf16, #tpu.memory_space<vmem>>, %arg5: memref<8x1xf32, #tpu.memory_space<vmem>>, %arg6: memref<8x512xbf16, #tpu.memory_space<vmem>>, %arg7: memref<8x512xf32, #tpu.memory_space<vmem>>, %arg8: memref<1x512xf32, #tpu.memory_space<vmem>>, %arg9: memref<104x512xf32, #tpu.memory_space<vmem>>) attributes {dimension_semantics = [#tpu.dimension_semantics<parallel>], iteration_bounds = array<i64: 2>, scalar_prefetch = 0 : i64, scratch_operands = 1 : i64, tpu.core_type = #tpu.core_type<tc>, window_params = [{pipeline_mode = #tpu.pipeline_mode<synchronous>, transform_indices = @transform_0, window_bounds = array<i64: 4, 1152>}, {pipeline_mode = #tpu.pipeline_mode<synchronous>, transform_indices = @transform_1, window_bounds = array<i64: 8, 104>}, {pipeline_mode = #tpu.pipeline_mode<synchronous>, transform_indices = @transform_2, window_bounds = array<i64: 8, 1>}, {pipeline_mode = #tpu.pipeline_mode<synchronous>, transform_indices = @transform_3, window_bounds = array<i64: 8, 104>}, {pipeline_mode = #tpu.pipeline_mode<synchronous>, transform_indices = @transform_4, window_bounds = array<i64: 8, 1>}, {transform_indices = @transform_5, window_bounds = array<i64: 8, 512>}, {transform_indices = @transform_6, window_bounds = array<i64: 8, 512>}, {transform_indices = @transform_7, window_bounds = array<i64: 1, 512>}]} {
    %c512_i32 = arith.constant 512 : i32
    %0 = arith.muli %arg0, %c512_i32 : i32
    %1 = tpu.assume_multiple %0, 128 : i32
    %c0 = arith.constant 0 : index
    %2 = arith.index_cast %1 : i32 to index
    %3 = vector.load %arg1[%c0, %2] : memref<4x1152xbf16, #tpu.memory_space<vmem>>, vector<4x640xbf16>
    %4 = arith.extf %3 : vector<4x640xbf16> to vector<4x640xf32>
    %cst = arith.constant 0.000000e+00 : f32
    %5 = vector.broadcast %cst : f32 to vector<4x512xf32>
    %c100 = arith.constant 100 : index
    %c0_0 = arith.constant 0 : index
    %6 = vector.load %arg9[%c100, %c0_0] : memref<104x512xf32, #tpu.memory_space<vmem>>, vector<4x512xf32>
    tpu.vector_store %arg9[%c100, %c0_0], %5 {strides = array<i32>} : memref<104x512xf32, #tpu.memory_space<vmem>>, vector<4x512xf32>,
    %7 = vector.extract_strided_slice %4 {offsets = [0, 0], sizes = [4, 512], strides = [1, 1]} : vector<4x640xf32> to vector<4x512xf32>
    %c0_1 = arith.constant 0 : index
    %c0_2 = arith.constant 0 : index
    %8 = vector.load %arg9[%c0_1, %c0_2] : memref<104x512xf32, #tpu.memory_space<vmem>>, vector<4x512xf32>
    tpu.vector_store %arg9[%c0_1, %c0_2], %7 {strides = array<i32>} : memref<104x512xf32, #tpu.memory_space<vmem>>, vector<4x512xf32>,
    %9 = vector.extract_strided_slice %4 {offsets = [0, 1], sizes = [4, 512], strides = [1, 1]} : vector<4x640xf32> to vector<4x512xf32>
    %c4 = arith.constant 4 : index
    %c0_3 = arith.constant 0 : index
    %10 = vector.load %arg9[%c4, %c0_3] : memref<104x512xf32, #tpu.memory_space<vmem>>, vector<4x512xf32>
    tpu.vector_store %arg9[%c4, %c0_3], %9 {strides = array<i32>} : memref<104x512xf32, #tpu.memory_space<vmem>>, vector<4x512xf32>,
    %11 = vector.extract_strided_slice %4 {offsets = [0, 2], sizes = [4, 512], strides = [1, 1]} : vector<4x640xf32> to vector<4x512xf32>
    %c8 = arith.constant 8 : index
    %c0_4 = arith.constant 0 : index
    %12 = vector.load %arg9[%c8, %c0_4] : memref<104x512xf32, #tpu.memory_space<vmem>>, vector<4x512xf32>
    tpu.vector_store %arg9[%c8, %c0_4], %11 {strides = array<i32>} : memref<104x512xf32, #tpu.memory_space<vmem>>, vector<4x512xf32>,
    %13 = vector.extract_strided_slice %4 {offsets = [0, 3], sizes = [4, 512], strides = [1, 1]} : vector<4x640xf32> to vector<4x512xf32>
    %c12 = arith.constant 12 : index
    %c0_5 = arith.constant 0 : index
    %14 = vector.load %arg9[%c12, %c0_5] : memref<104x512xf32, #tpu.memory_space<vmem>>, vector<4x512xf32>
    tpu.vector_store %arg9[%c12, %c0_5], %13 {strides = array<i32>} : memref<104x512xf32, #tpu.memory_space<vmem>>, vector<4x512xf32>,
    %15 = vector.extract_strided_slice %4 {offsets = [0, 4], sizes = [4, 512], strides = [1, 1]} : vector<4x640xf32> to vector<4x512xf32>
    %c16 = arith.constant 16 : index
    %c0_6 = arith.constant 0 : index
    %16 = vector.load %arg9[%c16, %c0_6] : memref<104x512xf32, #tpu.memory_space<vmem>>, vector<4x512xf32>
    tpu.vector_store %arg9[%c16, %c0_6], %15 {strides = array<i32>} : memref<104x512xf32, #tpu.memory_space<vmem>>, vector<4x512xf32>,
    %17 = vector.extract_strided_slice %4 {offsets = [0, 20], sizes = [4, 512], strides = [1, 1]} : vector<4x640xf32> to vector<4x512xf32>
    %c20 = arith.constant 20 : index
    %c0_7 = arith.constant 0 : index
    %18 = vector.load %arg9[%c20, %c0_7] : memref<104x512xf32, #tpu.memory_space<vmem>>, vector<4x512xf32>
    tpu.vector_store %arg9[%c20, %c0_7], %17 {strides = array<i32>} : memref<104x512xf32, #tpu.memory_space<vmem>>, vector<4x512xf32>,
    %19 = vector.extract_strided_slice %4 {offsets = [0, 21], sizes = [4, 512], strides = [1, 1]} : vector<4x640xf32> to vector<4x512xf32>
    %c24 = arith.constant 24 : index
    %c0_8 = arith.constant 0 : index
    %20 = vector.load %arg9[%c24, %c0_8] : memref<104x512xf32, #tpu.memory_space<vmem>>, vector<4x512xf32>
    tpu.vector_store %arg9[%c24, %c0_8], %19 {strides = array<i32>} : memref<104x512xf32, #tpu.memory_space<vmem>>, vector<4x512xf32>,
    %21 = vector.extract_strided_slice %4 {offsets = [0, 22], sizes = [4, 512], strides = [1, 1]} : vector<4x640xf32> to vector<4x512xf32>
    %c28 = arith.constant 28 : index
    %c0_9 = arith.constant 0 : index
    %22 = vector.load %arg9[%c28, %c0_9] : memref<104x512xf32, #tpu.memory_space<vmem>>, vector<4x512xf32>
    tpu.vector_store %arg9[%c28, %c0_9], %21 {strides = array<i32>} : memref<104x512xf32, #tpu.memory_space<vmem>>, vector<4x512xf32>,
    %23 = vector.extract_strided_slice %4 {offsets = [0, 23], sizes = [4, 512], strides = [1, 1]} : vector<4x640xf32> to vector<4x512xf32>
    %c32 = arith.constant 32 : index
    %c0_10 = arith.constant 0 : index
    %24 = vector.load %arg9[%c32, %c0_10] : memref<104x512xf32, #tpu.memory_space<vmem>>, vector<4x512xf32>
    tpu.vector_store %arg9[%c32, %c0_10], %23 {strides = array<i32>} : memref<104x512xf32, #tpu.memory_space<vmem>>, vector<4x512xf32>,
    %25 = vector.extract_strided_slice %4 {offsets = [0, 24], sizes = [4, 512], strides = [1, 1]} : vector<4x640xf32> to vector<4x512xf32>
    %c36 = arith.constant 36 : index
    %c0_11 = arith.constant 0 : index
    %26 = vector.load %arg9[%c36, %c0_11] : memref<104x512xf32, #tpu.memory_space<vmem>>, vector<4x512xf32>
    tpu.vector_store %arg9[%c36, %c0_11], %25 {strides = array<i32>} : memref<104x512xf32, #tpu.memory_space<vmem>>, vector<4x512xf32>,
    %27 = vector.extract_strided_slice %4 {offsets = [0, 40], sizes = [4, 512], strides = [1, 1]} : vector<4x640xf32> to vector<4x512xf32>
    %c40 = arith.constant 40 : index
    %c0_12 = arith.constant 0 : index
    %28 = vector.load %arg9[%c40, %c0_12] : memref<104x512xf32, #tpu.memory_space<vmem>>, vector<4x512xf32>
    tpu.vector_store %arg9[%c40, %c0_12], %27 {strides = array<i32>} : memref<104x512xf32, #tpu.memory_space<vmem>>, vector<4x512xf32>,
    %29 = vector.extract_strided_slice %4 {offsets = [0, 41], sizes = [4, 512], strides = [1, 1]} : vector<4x640xf32> to vector<4x512xf32>
    %c44 = arith.constant 44 : index
    %c0_13 = arith.constant 0 : index
    %30 = vector.load %arg9[%c44, %c0_13] : memref<104x512xf32, #tpu.memory_space<vmem>>, vector<4x512xf32>
    tpu.vector_store %arg9[%c44, %c0_13], %29 {strides = array<i32>} : memref<104x512xf32, #tpu.memory_space<vmem>>, vector<4x512xf32>,
    %31 = vector.extract_strided_slice %4 {offsets = [0, 42], sizes = [4, 512], strides = [1, 1]} : vector<4x640xf32> to vector<4x512xf32>
    %c48 = arith.constant 48 : index
    %c0_14 = arith.constant 0 : index
    %32 = vector.load %arg9[%c48, %c0_14] : memref<104x512xf32, #tpu.memory_space<vmem>>, vector<4x512xf32>
    tpu.vector_store %arg9[%c48, %c0_14], %31 {strides = array<i32>} : memref<104x512xf32, #tpu.memory_space<vmem>>, vector<4x512xf32>,
    %33 = vector.extract_strided_slice %4 {offsets = [0, 43], sizes = [4, 512], strides = [1, 1]} : vector<4x640xf32> to vector<4x512xf32>
    %c52 = arith.constant 52 : index
    %c0_15 = arith.constant 0 : index
    %34 = vector.load %arg9[%c52, %c0_15] : memref<104x512xf32, #tpu.memory_space<vmem>>, vector<4x512xf32>
    tpu.vector_store %arg9[%c52, %c0_15], %33 {strides = array<i32>} : memref<104x512xf32, #tpu.memory_space<vmem>>, vector<4x512xf32>,
    %35 = vector.extract_strided_slice %4 {offsets = [0, 44], sizes = [4, 512], strides = [1, 1]} : vector<4x640xf32> to vector<4x512xf32>
    %c56 = arith.constant 56 : index
    %c0_16 = arith.constant 0 : index
    %36 = vector.load %arg9[%c56, %c0_16] : memref<104x512xf32, #tpu.memory_space<vmem>>, vector<4x512xf32>
    tpu.vector_store %arg9[%c56, %c0_16], %35 {strides = array<i32>} : memref<104x512xf32, #tpu.memory_space<vmem>>, vector<4x512xf32>,
    %37 = vector.extract_strided_slice %4 {offsets = [0, 60], sizes = [4, 512], strides = [1, 1]} : vector<4x640xf32> to vector<4x512xf32>
    %c60 = arith.constant 60 : index
    %c0_17 = arith.constant 0 : index
    %38 = vector.load %arg9[%c60, %c0_17] : memref<104x512xf32, #tpu.memory_space<vmem>>, vector<4x512xf32>
    tpu.vector_store %arg9[%c60, %c0_17], %37 {strides = array<i32>} : memref<104x512xf32, #tpu.memory_space<vmem>>, vector<4x512xf32>,
    %39 = vector.extract_strided_slice %4 {offsets = [0, 61], sizes = [4, 512], strides = [1, 1]} : vector<4x640xf32> to vector<4x512xf32>
    %c64 = arith.constant 64 : index
    %c0_18 = arith.constant 0 : index
    %40 = vector.load %arg9[%c64, %c0_18] : memref<104x512xf32, #tpu.memory_space<vmem>>, vector<4x512xf32>
    tpu.vector_store %arg9[%c64, %c0_18], %39 {strides = array<i32>} : memref<104x512xf32, #tpu.memory_space<vmem>>, vector<4x512xf32>,
    %41 = vector.extract_strided_slice %4 {offsets = [0, 62], sizes = [4, 512], strides = [1, 1]} : vector<4x640xf32> to vector<4x512xf32>
    %c68 = arith.constant 68 : index
    %c0_19 = arith.constant 0 : index
    %42 = vector.load %arg9[%c68, %c0_19] : memref<104x512xf32, #tpu.memory_space<vmem>>, vector<4x512xf32>
    tpu.vector_store %arg9[%c68, %c0_19], %41 {strides = array<i32>} : memref<104x512xf32, #tpu.memory_space<vmem>>, vector<4x512xf32>,
    %43 = vector.extract_strided_slice %4 {offsets = [0, 63], sizes = [4, 512], strides = [1, 1]} : vector<4x640xf32> to vector<4x512xf32>
    %c72 = arith.constant 72 : index
    %c0_20 = arith.constant 0 : index
    %44 = vector.load %arg9[%c72, %c0_20] : memref<104x512xf32, #tpu.memory_space<vmem>>, vector<4x512xf32>
    tpu.vector_store %arg9[%c72, %c0_20], %43 {strides = array<i32>} : memref<104x512xf32, #tpu.memory_space<vmem>>, vector<4x512xf32>,
    %45 = vector.extract_strided_slice %4 {offsets = [0, 64], sizes = [4, 512], strides = [1, 1]} : vector<4x640xf32> to vector<4x512xf32>
    %c76 = arith.constant 76 : index
    %c0_21 = arith.constant 0 : index
    %46 = vector.load %arg9[%c76, %c0_21] : memref<104x512xf32, #tpu.memory_space<vmem>>, vector<4x512xf32>
    tpu.vector_store %arg9[%c76, %c0_21], %45 {strides = array<i32>} : memref<104x512xf32, #tpu.memory_space<vmem>>, vector<4x512xf32>,
    %47 = vector.extract_strided_slice %4 {offsets = [0, 80], sizes = [4, 512], strides = [1, 1]} : vector<4x640xf32> to vector<4x512xf32>
    %c80 = arith.constant 80 : index
    %c0_22 = arith.constant 0 : index
    %48 = vector.load %arg9[%c80, %c0_22] : memref<104x512xf32, #tpu.memory_space<vmem>>, vector<4x512xf32>
    tpu.vector_store %arg9[%c80, %c0_22], %47 {strides = array<i32>} : memref<104x512xf32, #tpu.memory_space<vmem>>, vector<4x512xf32>,
    %49 = vector.extract_strided_slice %4 {offsets = [0, 81], sizes = [4, 512], strides = [1, 1]} : vector<4x640xf32> to vector<4x512xf32>
    %c84 = arith.constant 84 : index
    %c0_23 = arith.constant 0 : index
    %50 = vector.load %arg9[%c84, %c0_23] : memref<104x512xf32, #tpu.memory_space<vmem>>, vector<4x512xf32>
    tpu.vector_store %arg9[%c84, %c0_23], %49 {strides = array<i32>} : memref<104x512xf32, #tpu.memory_space<vmem>>, vector<4x512xf32>,
    %51 = vector.extract_strided_slice %4 {offsets = [0, 82], sizes = [4, 512], strides = [1, 1]} : vector<4x640xf32> to vector<4x512xf32>
    %c88 = arith.constant 88 : index
    %c0_24 = arith.constant 0 : index
    %52 = vector.load %arg9[%c88, %c0_24] : memref<104x512xf32, #tpu.memory_space<vmem>>, vector<4x512xf32>
    tpu.vector_store %arg9[%c88, %c0_24], %51 {strides = array<i32>} : memref<104x512xf32, #tpu.memory_space<vmem>>, vector<4x512xf32>,
    %53 = vector.extract_strided_slice %4 {offsets = [0, 83], sizes = [4, 512], strides = [1, 1]} : vector<4x640xf32> to vector<4x512xf32>
    %c92 = arith.constant 92 : index
    %c0_25 = arith.constant 0 : index
    %54 = vector.load %arg9[%c92, %c0_25] : memref<104x512xf32, #tpu.memory_space<vmem>>, vector<4x512xf32>
    tpu.vector_store %arg9[%c92, %c0_25], %53 {strides = array<i32>} : memref<104x512xf32, #tpu.memory_space<vmem>>, vector<4x512xf32>,
    %55 = vector.extract_strided_slice %4 {offsets = [0, 84], sizes = [4, 512], strides = [1, 1]} : vector<4x640xf32> to vector<4x512xf32>
    %c96 = arith.constant 96 : index
    %c0_26 = arith.constant 0 : index
    %56 = vector.load %arg9[%c96, %c0_26] : memref<104x512xf32, #tpu.memory_space<vmem>>, vector<4x512xf32>
    tpu.vector_store %arg9[%c96, %c0_26], %55 {strides = array<i32>} : memref<104x512xf32, #tpu.memory_space<vmem>>, vector<4x512xf32>,
    %c0_27 = arith.constant 0 : index
    %c0_28 = arith.constant 0 : index
    %57 = vector.load %arg9[%c0_27, %c0_28] : memref<104x512xf32, #tpu.memory_space<vmem>>, vector<104x512xf32>
    %c0_29 = arith.constant 0 : index
    %c0_30 = arith.constant 0 : index
    %58 = vector.load %arg2[%c0_29, %c0_30] : memref<8x104xbf16, #tpu.memory_space<vmem>>, vector<8x104xbf16>
    %59 = arith.truncf %57 : vector<104x512xf32> to vector<104x512xbf16>
    %cst_31 = arith.constant dense<0.000000e+00> : vector<8x512xf32>
    %60 = tpu.matmul %58, %59, %cst_31 {dimension_numbers = #tpu.dot_dimension_numbers<[1], [0], [0], [1], [0, 0, 1, 1], [], []>} : vector<8x104xbf16>, vector<104x512xbf16>, vector<8x512xf32> -> vector<8x512xf32>
    %c0_32 = arith.constant 0 : index
    %c0_33 = arith.constant 0 : index
    %61 = vector.load %arg3[%c0_32, %c0_33] : memref<8x1xf32, #tpu.memory_space<vmem>>, vector<8x1xf32>
    %62 = vector.broadcast %61 : vector<8x1xf32> to vector<8x512xf32>
    %63 = arith.addf %60, %62 : vector<8x512xf32>
    %c0_34 = arith.constant 0 : index
    %c0_35 = arith.constant 0 : index
    %64 = vector.load %arg4[%c0_34, %c0_35] : memref<8x104xbf16, #tpu.memory_space<vmem>>, vector<8x104xbf16>
    %65 = arith.mulf %57, %57 : vector<104x512xf32>
    %66 = arith.truncf %65 : vector<104x512xf32> to vector<104x512xbf16>
    %cst_36 = arith.constant dense<0.000000e+00> : vector<8x512xf32>
    %67 = tpu.matmul %64, %66, %cst_36 {dimension_numbers = #tpu.dot_dimension_numbers<[1], [0], [0], [1], [0, 0, 1, 1], [], []>} : vector<8x104xbf16>, vector<104x512xbf16>, vector<8x512xf32> -> vector<8x512xf32>
    %c0_37 = arith.constant 0 : index
    %c0_38 = arith.constant 0 : index
    %68 = vector.load %arg5[%c0_37, %c0_38] : memref<8x1xf32, #tpu.memory_space<vmem>>, vector<8x1xf32>
    %69 = vector.broadcast %68 : vector<8x1xf32> to vector<8x512xf32>
    %70 = arith.addf %67, %69 : vector<8x512xf32>
    %71 = arith.negf %63 : vector<8x512xf32>
    %72 = math.exp %71 : vector<8x512xf32>
    %cst_39 = arith.constant 1.000000e+00 : f32
    %73 = vector.broadcast %cst_39 : f32 to vector<8x512xf32>
    %74 = arith.addf %73, %72 : vector<8x512xf32>
    %75 = arith.divf %73, %74 : vector<8x512xf32>
    %76 = math.absf %70 : vector<8x512xf32>
    %cst_40 = arith.constant 0.000000e+00 : f32
    %77 = vector.broadcast %cst_40 : f32 to vector<8x512xf32>
    %78 = arith.subf %77, %76 : vector<8x512xf32>
    %79 = math.exp %78 : vector<8x512xf32>
    %cst_41 = arith.constant 1.000000e+00 : f32
    %80 = vector.broadcast %cst_41 : f32 to vector<8x512xf32>
    %81 = arith.addf %80, %79 : vector<8x512xf32>
    %cst_42 = arith.constant 1.000000e+00 : f32
    %82 = vector.broadcast %cst_42 : f32 to vector<8x512xf32>
    %83 = arith.divf %82, %81 : vector<8x512xf32>
    %cst_43 = arith.constant 0.000000e+00 : f32
    %84 = vector.broadcast %cst_43 : f32 to vector<8x512xf32>
    %85 = arith.cmpf oge, %70, %84 : vector<8x512xf32>
    %86 = arith.mulf %79, %83 : vector<8x512xf32>
    %87 = arith.select %85, %83, %86 : vector<8x512xi1>, vector<8x512xf32>
    %cst_44 = arith.constant 0.000000e+00 : f32
    %88 = vector.broadcast %cst_44 : f32 to vector<8x512xf32>
    %89 = arith.minimumf %70, %88 : vector<8x512xf32>
    %90 = math.log1p %79 : vector<8x512xf32>
    %91 = arith.subf %89, %90 : vector<8x512xf32>
    %c0_45 = arith.constant 0 : index
    %c0_46 = arith.constant 0 : index
    %92 = vector.load %arg6[%c0_45, %c0_46] : memref<8x512xbf16, #tpu.memory_space<vmem>>, vector<8x512xbf16>
    %93 = arith.extf %92 : vector<8x512xbf16> to vector<8x512xf32>
    %94 = math.sqrt %87 : vector<8x512xf32>
    %95 = arith.mulf %94, %93 : vector<8x512xf32>
    %96 = arith.addf %75, %95 : vector<8x512xf32>
    %cst_47 = arith.constant 0.000000e+00 : f32
    %97 = vector.broadcast %cst_47 : f32 to vector<8x512xf32>
    %98 = arith.maximumf %96, %97 : vector<8x512xf32>
    %c0_48 = arith.constant 0 : index
    %c0_49 = arith.constant 0 : index
    %99 = vector.load %arg7[%c0_48, %c0_49] : memref<8x512xf32, #tpu.memory_space<vmem>>, vector<8x512xf32>
    tpu.vector_store %arg7[%c0_48, %c0_49], %98 {strides = array<i32>} : memref<8x512xf32, #tpu.memory_space<vmem>>, vector<8x512xf32>,
    %100 = arith.mulf %75, %75 : vector<8x512xf32>
    %101 = arith.addf %87, %100 : vector<8x512xf32>
    %102 = arith.subf %101, %91 : vector<8x512xf32>
    %cst_50 = arith.constant 1.000000e+00 : f32
    %103 = vector.broadcast %cst_50 : f32 to vector<8x512xf32>
    %104 = arith.subf %102, %103 : vector<8x512xf32>
    %cst_51 = arith.constant dense<0.000000e+00> : vector<512xf32>
    %105 = vector.multi_reduction <add>, %104, %cst_51 [0] : vector<8x512xf32> to vector<512xf32>
    %106 = vector.shape_cast %105 : vector<512xf32> to vector<1x512xf32>
    %c0_52 = arith.constant 0 : index
    %c0_53 = arith.constant 0 : index
    %107 = vector.load %arg8[%c0_52, %c0_53] : memref<1x512xf32, #tpu.memory_space<vmem>>, vector<1x512xf32>
    tpu.vector_store %arg8[%c0_52, %c0_53], %106 {strides = array<i32>} : memref<1x512xf32, #tpu.memory_space<vmem>>, vector<1x512xf32>,
    return
  }
  func.func @transform_0(%arg0: i32) -> (i32, i32) {
    %c0_i32 = arith.constant 0 : i32
    %c0_i32_0 = arith.constant 0 : i32
    %c0_i32_1 = arith.constant 0 : i32
    return %c0_i32, %c0_i32_0 : i32, i32
  }
  func.func @transform_1(%arg0: i32) -> (i32, i32) {
    %c0_i32 = arith.constant 0 : i32
    %c0_i32_0 = arith.constant 0 : i32
    %c0_i32_1 = arith.constant 0 : i32
    return %c0_i32, %c0_i32_0 : i32, i32
  }
  func.func @transform_2(%arg0: i32) -> (i32, i32) {
    %c0_i32 = arith.constant 0 : i32
    %c0_i32_0 = arith.constant 0 : i32
    %c0_i32_1 = arith.constant 0 : i32
    return %c0_i32, %c0_i32_0 : i32, i32
  }
  func.func @transform_3(%arg0: i32) -> (i32, i32) {
    %c0_i32 = arith.constant 0 : i32
    %c0_i32_0 = arith.constant 0 : i32
    %c0_i32_1 = arith.constant 0 : i32
    return %c0_i32, %c0_i32_0 : i32, i32
  }
  func.func @transform_4(%arg0: i32) -> (i32, i32) {
    %c0_i32 = arith.constant 0 : i32
    %c0_i32_0 = arith.constant 0 : i32
    %c0_i32_1 = arith.constant 0 : i32
    return %c0_i32, %c0_i32_0 : i32, i32
  }
  func.func @transform_5(%arg0: i32) -> (i32, i32) {
    %c0_i32 = arith.constant 0 : i32
    %c0_i32_0 = arith.constant 0 : i32
    return %c0_i32, %arg0 : i32, i32
  }
  func.func @transform_6(%arg0: i32) -> (i32, i32) {
    %c0_i32 = arith.constant 0 : i32
    %c0_i32_0 = arith.constant 0 : i32
    return %c0_i32, %arg0 : i32, i32
  }
  func.func @transform_7(%arg0: i32) -> (i32, i32) {
    %c0_i32 = arith.constant 0 : i32
    %c0_i32_0 = arith.constant 0 : i32
    return %c0_i32, %arg0 : i32, i32
  }
}

</mosaic_0001>

<llo_original>
// kernel: tpu_custom_call.1
$region0: #{tpu_custom_call.1}
  #allocation0 [shape = 'u32[]', space=smem, size = 0x4, offset = 0x4, fixed_abs, tag = 'smem constant byte address 0x4 - core index']
  #allocation1 [shape = 'u32[144,128]{1,0:T(1,128)}', space=vmem, size = 0x12000, scoped, tag = 'internal scratch']
  #allocation2 [shape = 'f32[104,512]{1,0:T(8,128)}', space=vmem, size = 0x34000, scoped, tag = 'scratch operand']
  %s0 = inlined_call_operand.hbm [shape: bf16[4,1152], index: 0, kind: input, shape index: {}]
  %s1 = inlined_call_operand.vmem [shape: bf16[8,104], index: 1, kind: input, shape index: {}]
  %s2 = inlined_call_operand.vmem [shape: f32[8,1], index: 2, kind: input, shape index: {}]
  %s3 = inlined_call_operand.hbm [shape: bf16[8,104], index: 3, kind: input, shape index: {}]
  %s4 = inlined_call_operand.vmem [shape: f32[8,1], index: 4, kind: input, shape index: {}]
  %s5 = inlined_call_operand.vmem [shape: bf16[8,1024], index: 5, kind: input, shape index: {}]
  %s6 = inlined_call_operand.hbm [shape: f32[8,1024], index: 6, kind: output, shape index: {0}]
  %s7 = inlined_call_operand.hbm [shape: f32[1,1024], index: 7, kind: output, shape index: {1}]
  %8 = xla_tuple %s6, %s7
  %s9 = sld [smem:[#allocation0]]
  $region73: #{tpu_custom_call.1} parent=0
    _
  %s11 = ssub.s32 1, %s9
  %s12 = scalar_select 0, %s11, %s9
  $region1: #{tpu_custom_call.1} parent=0
    #allocation3 [shape = 'u8[9216]{0}', space=vmem, size = 0x2400, scoped, tag = 'input window, operand 0, single buffered']
    #allocation4 [shape = 's32[2]{0}', space=sflag, size = 0x8, scoped, tag = 'scoped memory for tpu_custom_call.1']
    #allocation5 [shape = 's32[2]{0}', space=sflag, size = 0x8, scoped, tag = 'scoped memory for tpu_custom_call.1']
    #allocation6 [shape = 'u8[2048]{0}', space=vmem, size = 0x800, scoped, tag = 'input window, operand 3, single buffered']
    #allocation7 [shape = 's32[1]{0}', space=sflag, size = 0x4, scoped, tag = 'scoped memory for tpu_custom_call.1']
    #allocation8 [shape = 'u8[32768]{0}', space=vmem, size = 0x8000, scoped, tag = 'output window, operand 0']
    #allocation9 [shape = 'u8[4096]{0}', space=vmem, size = 0x1000, scoped, tag = 'output window, operand 1']
    #allocation10 [shape = 's32[2]{0}', space=sflag, size = 0x8, scoped, tag = 'scoped memory for tpu_custom_call.1']
    %13 = vsyncpa [#allocation4], 0
    %14 = vsyncpa [#allocation7], 0
    %15 = vsyncpa [#allocation5], 0
    %s16 = scalar_lea.sflag [#allocation5], 1
    %17 = vsyncpa %s16, 0
    %18 = vsyncpa [#allocation10], 0
    %s19 = scalar_lea.sflag [#allocation10], 1
    %20 = vsyncpa %s19, 0
    loop: start=0, step=1, limit=4
    $region2: #{tpu_custom_call.1} parent=1 // loop_pre_header
      _
    $region3: #{tpu_custom_call.1} parent=1 // loop_header
      %s22 = sphi 0, %s26
      %p23 = scmp.ge.s32.totalorder %s22, 4
      %s30 = sphi 0, %s30
      %s32 = sphi 0, %s30
      %s33 = sphi 0, %s32
      %s47 = sphi 0, %s33
      %s51 = sphi 0, %s51
      %s53 = sphi 0, %s51
      %s54 = sphi 0, %s53
      %s68 = sphi 0, %s54
      %s72 = sphi 0, %s72
      %s74 = sphi 0, %s72
      %s75 = sphi 0, %s74
      %s89 = sphi 0, %s75
      %s93 = sphi 0, %s93
      %s95 = sphi 0, %s93
      %s96 = sphi 0, %s95
      %s110 = sphi 0, %s96
      %s114 = sphi 0, %s114
      %s116 = sphi 0, %s114
      %s117 = sphi 0, %s116
      %s131 = sphi 0, %s117
      %s137 = sphi 0, %s139
      %s140 = sphi 0, %s137
      %s141 = sphi 0, %s140
      %s157 = sphi 0, %s141
      %s163 = sphi 0, %s165
      %s166 = sphi 0, %s163
      %s167 = sphi 0, %s166
      %s183 = sphi 0, %s167
      %s189 = sphi 0, %s191
      %s192 = sphi 0, %s189
      %s193 = sphi 0, %s192
      %s209 = sphi 0, %s193
    $region4: #{tpu_custom_call.1} parent=1 // loop_header_branch
      %25 = sbr.rel (%p23) target = $region8
    $region5: #{tpu_custom_call.1} parent=1 // loop_body
      %s27 = ssub.s32 %s22, 1
      %s28 = ssub.s32 %s22, 2
      %s29 = sadd.s32 %s22, 1
      %s31 = sadd.s32 %s30, 1
      %p34 = scmp.eq.s32.totalorder %s22, 1
      %p35 = scmp.ne.s32.totalorder %s30, %s32
      %p36 = scmp.eq.s32.totalorder %s22, 0
      %p37 = por %p35, %p36
      %p38 = scmp.ne.s32.totalorder %s30, %s32
      %p39 = scmp.eq.s32.totalorder %s27, 1
      %p40 = por %p38, %p39
      %p41 = scmp.ne.s32.totalorder %s32, %s33
      %p42 = scmp.eq.s32.totalorder %s27, 0
      %p43 = por %p41, %p42
      %p44 = scmp.ne.s32.totalorder %s32, %s33
      %p45 = scmp.eq.s32.totalorder %s28, 1
      %p46 = por %p44, %p45
      %p48 = scmp.ne.s32.totalorder %s33, %s47
      %p49 = scmp.eq.s32.totalorder %s28, 0
      %p50 = por %p48, %p49
      %s52 = sadd.s32 %s51, 1
      %p55 = scmp.eq.s32.totalorder %s22, 1
      %p56 = scmp.ne.s32.totalorder %s51, %s53
      %p57 = scmp.eq.s32.totalorder %s22, 0
      %p58 = por %p56, %p57
      %p59 = scmp.ne.s32.totalorder %s51, %s53
      %p60 = scmp.eq.s32.totalorder %s27, 1
      %p61 = por %p59, %p60
      %p62 = scmp.ne.s32.totalorder %s53, %s54
      %p63 = scmp.eq.s32.totalorder %s27, 0
      %p64 = por %p62, %p63
      %p65 = scmp.ne.s32.totalorder %s53, %s54
      %p66 = scmp.eq.s32.totalorder %s28, 1
      %p67 = por %p65, %p66
      %p69 = scmp.ne.s32.totalorder %s54, %s68
      %p70 = scmp.eq.s32.totalorder %s28, 0
      %p71 = por %p69, %p70
      %s73 = sadd.s32 %s72, 1
      %p76 = scmp.eq.s32.totalorder %s22, 1
      %p77 = scmp.ne.s32.totalorder %s72, %s74
      %p78 = scmp.eq.s32.totalorder %s22, 0
      %p79 = por %p77, %p78
      %p80 = scmp.ne.s32.totalorder %s72, %s74
      %p81 = scmp.eq.s32.totalorder %s27, 1
      %p82 = por %p80, %p81
      %p83 = scmp.ne.s32.totalorder %s74, %s75
      %p84 = scmp.eq.s32.totalorder %s27, 0
      %p85 = por %p83, %p84
      %p86 = scmp.ne.s32.totalorder %s74, %s75
      %p87 = scmp.eq.s32.totalorder %s28, 1
      %p88 = por %p86, %p87
      %p90 = scmp.ne.s32.totalorder %s75, %s89
      %p91 = scmp.eq.s32.totalorder %s28, 0
      %p92 = por %p90, %p91
      %s94 = sadd.s32 %s93, 1
      %p97 = scmp.eq.s32.totalorder %s22, 1
      %p98 = scmp.ne.s32.totalorder %s93, %s95
      %p99 = scmp.eq.s32.totalorder %s22, 0
      %p100 = por %p98, %p99
      %p101 = scmp.ne.s32.totalorder %s93, %s95
      %p102 = scmp.eq.s32.totalorder %s27, 1
      %p103 = por %p101, %p102
      %p104 = scmp.ne.s32.totalorder %s95, %s96
      %p105 = scmp.eq.s32.totalorder %s27, 0
      %p106 = por %p104, %p105
      %p107 = scmp.ne.s32.totalorder %s95, %s96
      %p108 = scmp.eq.s32.totalorder %s28, 1
      %p109 = por %p107, %p108
      %p111 = scmp.ne.s32.totalorder %s96, %s110
      %p112 = scmp.eq.s32.totalorder %s28, 0
      %p113 = por %p111, %p112
      %s115 = sadd.s32 %s114, 1
      %p118 = scmp.eq.s32.totalorder %s22, 1
      %p119 = scmp.ne.s32.totalorder %s114, %s116
      %p120 = scmp.eq.s32.totalorder %s22, 0
      %p121 = por %p119, %p120
      %p122 = scmp.ne.s32.totalorder %s114, %s116
      %p123 = scmp.eq.s32.totalorder %s27, 1
      %p124 = por %p122, %p123
      %p125 = scmp.ne.s32.totalorder %s116, %s117
      %p126 = scmp.eq.s32.totalorder %s27, 0
      %p127 = por %p125, %p126
      %p128 = scmp.ne.s32.totalorder %s116, %s117
      %p129 = scmp.eq.s32.totalorder %s28, 1
      %p130 = por %p128, %p129
      %p132 = scmp.ne.s32.totalorder %s117, %s131
      %p133 = scmp.eq.s32.totalorder %s28, 0
      %p134 = por %p132, %p133
      %s135 = ssub.s32 %s22, %s29
      %p136 = scmp.eq.s32.totalorder %s135, 0
      %s138 = sadd.s32 %s137, 1
      %s139 = scalar_select %p136, %s137, %s138
      %p142 = pneg %p136
      %p143 = scmp.eq.s32.totalorder %s22, 1
      %p144 = por %p142, %p143
      %p145 = scmp.ne.s32.totalorder %s137, %s140
      %p146 = scmp.eq.s32.totalorder %s22, 0
      %p147 = por %p145, %p146
      %p148 = scmp.ne.s32.totalorder %s137, %s140
      %p149 = scmp.eq.s32.totalorder %s27, 1
      %p150 = por %p148, %p149
      %p151 = scmp.ne.s32.totalorder %s140, %s141
      %p152 = scmp.eq.s32.totalorder %s27, 0
      %p153 = por %p151, %p152
      %p154 = scmp.ne.s32.totalorder %s140, %s141
      %p155 = scmp.eq.s32.totalorder %s28, 1
      %p156 = por %p154, %p155
      %p158 = scmp.ne.s32.totalorder %s141, %s157
      %p159 = scmp.eq.s32.totalorder %s28, 0
      %p160 = por %p158, %p159
      %s161 = ssub.s32 %s22, %s29
      %p162 = scmp.eq.s32.totalorder %s161, 0
      %s164 = sadd.s32 %s163, 1
      %s165 = scalar_select %p162, %s163, %s164
      %p168 = pneg %p162
      %p169 = scmp.eq.s32.totalorder %s22, 1
      %p170 = por %p168, %p169
      %p171 = scmp.ne.s32.totalorder %s163, %s166
      %p172 = scmp.eq.s32.totalorder %s22, 0
      %p173 = por %p171, %p172
      %p174 = scmp.ne.s32.totalorder %s163, %s166
      %p175 = scmp.eq.s32.totalorder %s27, 1
      %p176 = por %p174, %p175
      %p177 = scmp.ne.s32.totalorder %s166, %s167
      %p178 = scmp.eq.s32.totalorder %s27, 0
      %p179 = por %p177, %p178
      %p180 = scmp.ne.s32.totalorder %s166, %s167
      %p181 = scmp.eq.s32.totalorder %s28, 1
      %p182 = por %p180, %p181
      %p184 = scmp.ne.s32.totalorder %s167, %s183
      %p185 = scmp.eq.s32.totalorder %s28, 0
      %p186 = por %p184, %p185
      %s187 = ssub.s32 %s22, %s29
      %p188 = scmp.eq.s32.totalorder %s187, 0
      %s190 = sadd.s32 %s189, 1
      %s191 = scalar_select %p188, %s189, %s190
      %p194 = pneg %p188
      %p195 = scmp.eq.s32.totalorder %s22, 1
      %p196 = por %p194, %p195
      %p197 = scmp.ne.s32.totalorder %s189, %s192
      %p198 = scmp.eq.s32.totalorder %s22, 0
      %p199 = por %p197, %p198
      %p200 = scmp.ne.s32.totalorder %s189, %s192
      %p201 = scmp.eq.s32.totalorder %s27, 1
      %p202 = por %p200, %p201
      %p203 = scmp.ne.s32.totalorder %s192, %s193
      %p204 = scmp.eq.s32.totalorder %s27, 0
      %p205 = por %p203, %p204
      %p206 = scmp.ne.s32.totalorder %s192, %s193
      %p207 = scmp.eq.s32.totalorder %s28, 1
      %p208 = por %p206, %p207
      %p210 = scmp.ne.s32.totalorder %s193, %s209
      %p211 = scmp.eq.s32.totalorder %s28, 0
      %p212 = por %p210, %p211
      %p213 = scmp.le.s32.totalorder 1, %s22
      %p214 = scmp.lt.s32.totalorder %s22, 3
      %p215 = pnand %p213, %p214
      %p216 = pneg %p215
      // Predicated region
      $region9: #{tpu_custom_call.1} parent=5 // pred_check
        _
      $region10: #{tpu_custom_call.1} parent=5 // pred_check_branch
        %218 = sbr.rel (%p215) target = $region12
      $region11: #{tpu_custom_call.1} parent=5 // pred_region
        %s219 = ssub.s32 %s22, 1
        // Predicated region
        $region13: #{tpu_custom_call.1} parent=11 // pred_check
          %p220 = pneg %p43
        $region14: #{tpu_custom_call.1} parent=11 // pred_check_branch
          %222 = sbr.rel (%p220) target = $region16
        $region15: #{tpu_custom_call.1} parent=11 // pred_region
          %s224 = ssub.s32 288, 288
          %225 = vsyncadd [#allocation4], %s224
          %s227 = sshll.u32 [#allocation3], 4
          %s228 = int_to_ptr.vmem [resolvable:$true] %s227
          %230 = dma.hbm_to_vmem [thread:$0]  %s0, 288, %s228, [#allocation4]
        $region16: #{tpu_custom_call.1} parent=11 // pred_fallthru
          _
        // Predicated region
        $region17: #{tpu_custom_call.1} parent=11 // pred_check
          %p231 = pneg %p64
        $region18: #{tpu_custom_call.1} parent=11 // pred_check_branch
          %233 = sbr.rel (%p231) target = $region20
        $region19: #{tpu_custom_call.1} parent=11 // pred_region
          _
        $region20: #{tpu_custom_call.1} parent=11 // pred_fallthru
          _
        // Predicated region
        $region21: #{tpu_custom_call.1} parent=11 // pred_check
          %p234 = pneg %p85
        $region22: #{tpu_custom_call.1} parent=11 // pred_check_branch
          %236 = sbr.rel (%p234) target = $region24
        $region23: #{tpu_custom_call.1} parent=11 // pred_region
          _
        $region24: #{tpu_custom_call.1} parent=11 // pred_fallthru
          _
        // Predicated region
        $region25: #{tpu_custom_call.1} parent=11 // pred_check
          %p237 = pneg %p106
        $region26: #{tpu_custom_call.1} parent=11 // pred_check_branch
          %239 = sbr.rel (%p237) target = $region28
        $region27: #{tpu_custom_call.1} parent=11 // pred_region
          %s241 = ssub.s32 64, 64
          %242 = vsyncadd [#allocation7], %s241
          %s244 = sshll.u32 [#allocation6], 4
          %s245 = int_to_ptr.vmem [resolvable:$true] %s244
          %247 = dma.hbm_to_vmem [thread:$0]  %s3, 64, %s245, [#allocation7]
        $region28: #{tpu_custom_call.1} parent=11 // pred_fallthru
          _
        // Predicated region
        $region29: #{tpu_custom_call.1} parent=11 // pred_check
          %p248 = pneg %p127
        $region30: #{tpu_custom_call.1} parent=11 // pred_check_branch
          %250 = sbr.rel (%p248) target = $region32
        $region31: #{tpu_custom_call.1} parent=11 // pred_region
          _
        $region32: #{tpu_custom_call.1} parent=11 // pred_fallthru
          _
      $region12: #{tpu_custom_call.1} parent=5 // pred_fallthru
        _
      %p251 = scmp.lt.s32.totalorder %s22, 2
      // Predicated region
      $region33: #{tpu_custom_call.1} parent=5 // pred_check
        %p252 = pneg %p251
      $region34: #{tpu_custom_call.1} parent=5 // pred_check_branch
        %254 = sbr.rel (%p252) target = $region36
      $region35: #{tpu_custom_call.1} parent=5 // pred_region
        // Predicated region
        $region37: #{tpu_custom_call.1} parent=35 // pred_check
          %p255 = pneg %p147
        $region38: #{tpu_custom_call.1} parent=35 // pred_check_branch
          %257 = sbr.rel (%p255) target = $region40
        $region39: #{tpu_custom_call.1} parent=35 // pred_region
          %s258 = smul.u32 4, %s22
          %p259 = scmp.lt.s32.totalorder %s258, 7
          %s260 = scalar_select %p259, %s258, 7
          %s261 = smul.addr %s260, 4
          %s262 = scalar_lea.vmem %s5, %s261
          %s263 = smul.u32 4, %s22
        $region40: #{tpu_custom_call.1} parent=35 // pred_fallthru
          _
      $region36: #{tpu_custom_call.1} parent=5 // pred_fallthru
        _
      %p264 = scmp.le.s32.totalorder 1, %s22
      %p265 = scmp.lt.s32.totalorder %s22, 3
      %p266 = pnand %p264, %p265
      %p267 = pneg %p266
      // Predicated region
      $region41: #{tpu_custom_call.1} parent=5 // pred_check
        _
      $region42: #{tpu_custom_call.1} parent=5 // pred_check_branch
        %269 = sbr.rel (%p266) target = $region44
      $region43: #{tpu_custom_call.1} parent=5 // pred_region
        %s270 = ssub.s32 %s22, 1
        // Predicated region
        $region45: #{tpu_custom_call.1} parent=43 // pred_check
          %p271 = pneg %p43
        $region46: #{tpu_custom_call.1} parent=43 // pred_check_branch
          %273 = sbr.rel (%p271) target = $region48
        $region47: #{tpu_custom_call.1} parent=43 // pred_region
          %274 = dma.done [#allocation4], 288
        $region48: #{tpu_custom_call.1} parent=43 // pred_fallthru
          _
        // Predicated region
        $region49: #{tpu_custom_call.1} parent=43 // pred_check
          %p275 = pneg %p106
        $region50: #{tpu_custom_call.1} parent=43 // pred_check_branch
          %277 = sbr.rel (%p275) target = $region52
        $region51: #{tpu_custom_call.1} parent=43 // pred_region
          %278 = dma.done [#allocation7], 64
        $region52: #{tpu_custom_call.1} parent=43 // pred_fallthru
          _
        %p279 = pneg %p43
        %p280 = pneg %p40
        %p281 = pneg %p64
        %p282 = pneg %p61
        %p283 = pneg %p85
        %p284 = pneg %p82
        %p285 = pneg %p106
        %p286 = pneg %p103
        %p287 = pneg %p127
        %p288 = pneg %p124
        %s289 = smul.u32 4, %s27
        %p290 = scmp.lt.s32.totalorder %s289, 7
        %s291 = scalar_select %p290, %s289, 7
        %s292 = smul.addr %s291, 4
        %s293 = scalar_lea.vmem %s5, %s292
        %p294 = pneg %p153
        %p295 = pneg %p150
        %p296 = pneg %p179
        %p297 = pneg %p176
        %s298 = sand.u32 %s166, 1
        %s299 = scalar_lea.sflag [#allocation5], %s298
        %s300 = sand.u32 %s166, 1
        %s301 = smul.addr %s300, 32
        %s302 = scalar_lea.vmem [#allocation8], %s301
        %p303 = pneg %p205
        %p304 = pneg %p202
        %s305 = sand.u32 %s192, 1
        %s306 = scalar_lea.sflag [#allocation10], %s305
        %s307 = sand.u32 %s192, 1
        %s308 = smul.addr %s307, 4
        %s309 = scalar_lea.vmem [#allocation9], %s308
        %s310 = smul.u32 4, %s27
        %p311 = scmp.lt.s32.totalorder %s310, 7
        %s312 = scalar_select %p311, %s310, 7
        %s313 = smul.addr %s312, 4
        %s314 = scalar_lea.vmem %s5, %s313
        %s315 = smul.u32 4, %s27
        %s316 = smul.u32 4, %s27
        %s317 = smul.u32 4, %s27
        %s319 = smul.u32 %s27, 512
        %s320 = sshra.s32 %s319, 7
        %s321 = sand.u32 %s319, 127
        %s322 = smul.addr %s320, 2
        %s323 = scalar_lea.vmem [#allocation3], %s322
        %v324 = vld [vmem:[%s323] sm:$0xff]
        %v325 = vld [vmem:[%s323 + $0x8] sm:$0x3]
        %v326 = vunpack.c.l.bf16 %v324
        %v327 = vunpack.c.h.bf16 %v324
        %v328 = vunpack.c.l.bf16 %v325
        %329 = vst [vmem:[#allocation2 + $0x180] sm:$0xf0] 0.0
        %330 = vst [vmem:[#allocation2 + $0x188] sm:$0xf0] 0.0
        %331 = vst [vmem:[#allocation2 + $0x190] sm:$0xf0] 0.0
        %332 = vst [vmem:[#allocation2 + $0x198] sm:$0xf0] 0.0
        %v335 = vcombine.high %v326, %v326
        %v336 = vcombine.high %v327, %v327
        %339 = vst [vmem:[#allocation2] sm:$0xf] %v326
        %340 = vst [vmem:[#allocation2 + $0x8] sm:$0xf] %v335
        %341 = vst [vmem:[#allocation2 + $0x10] sm:$0xf] %v327
        %342 = vst [vmem:[#allocation2 + $0x18] sm:$0xf] %v336
        %v344 = vcombine.low %v326, %v326
        %v345 = vcombine.low %v327, %v327
        %v346 = vcombine.low %v328, %v328
        %347 = vrot.lane.b32.xlu0 %v344, 127
        %v348 = vpop.permute.xlu0 %347
        %349 = vrot.lane.b32.xlu0 %v326, 127
        %v350 = vpop.permute.xlu0 %349
        %351 = vrot.lane.b32.xlu0 %v345, 127
        %v352 = vpop.permute.xlu0 %351
        %353 = vrot.lane.b32.xlu0 %v327, 127
        %v354 = vpop.permute.xlu0 %353
        %355 = vrot.lane.b32.xlu0 %v346, 127
        %v356 = vpop.permute.xlu0 %355
        %vm357 = vcmask 1039360
        %v358 = vsel %vm357, %v348, %v350
        %v359 = vsel %vm357, %v350, %v352
        %v360 = vsel %vm357, %v352, %v354
        %v361 = vsel %vm357, %v354, %v356
        %366 = vst [vmem:[#allocation2] sm:$0xf0] %v358
        %367 = vst [vmem:[#allocation2 + $0x8] sm:$0xf0] %v359
        %368 = vst [vmem:[#allocation2 + $0x10] sm:$0xf0] %v360
        %369 = vst [vmem:[#allocation2 + $0x18] sm:$0xf0] %v361
        %370 = vrot.lane.b32.xlu0 %v326, 126
        %v371 = vpop.permute.xlu0 %370
        %372 = vrot.lane.b32.xlu0 %v335, 126
        %v373 = vpop.permute.xlu0 %372
        %374 = vrot.lane.b32.xlu0 %v327, 126
        %v375 = vpop.permute.xlu0 %374
        %376 = vrot.lane.b32.xlu0 %v336, 126
        %v377 = vpop.permute.xlu0 %376
        %378 = vrot.lane.b32.xlu0 %v328, 126
        %v379 = vpop.permute.xlu0 %378
        %vm380 = vcmask 1031168
        %v381 = vsel %vm380, %v371, %v373
        %v382 = vsel %vm380, %v373, %v375
        %v383 = vsel %vm380, %v375, %v377
        %v384 = vsel %vm380, %v377, %v379
        %389 = vst [vmem:[#allocation2 + $0x20] sm:$0xf] %v381
        %390 = vst [vmem:[#allocation2 + $0x28] sm:$0xf] %v382
        %391 = vst [vmem:[#allocation2 + $0x30] sm:$0xf] %v383
        %392 = vst [vmem:[#allocation2 + $0x38] sm:$0xf] %v384
        %393 = vrot.lane.b32.xlu0 %v344, 125
        %v394 = vpop.permute.xlu0 %393
        %395 = vrot.lane.b32.xlu0 %v326, 125
        %v396 = vpop.permute.xlu0 %395
        %397 = vrot.lane.b32.xlu0 %v345, 125
        %v398 = vpop.permute.xlu0 %397
        %399 = vrot.lane.b32.xlu0 %v327, 125
        %v400 = vpop.permute.xlu0 %399
        %401 = vrot.lane.b32.xlu0 %v346, 125
        %v402 = vpop.permute.xlu0 %401
        %vm403 = vcmask 1022976
        %v404 = vsel %vm403, %v394, %v396
        %v405 = vsel %vm403, %v396, %v398
        %v406 = vsel %vm403, %v398, %v400
        %v407 = vsel %vm403, %v400, %v402
        %412 = vst [vmem:[#allocation2 + $0x20] sm:$0xf0] %v404
        %413 = vst [vmem:[#allocation2 + $0x28] sm:$0xf0] %v405
        %414 = vst [vmem:[#allocation2 + $0x30] sm:$0xf0] %v406
        %415 = vst [vmem:[#allocation2 + $0x38] sm:$0xf0] %v407
        %416 = vrot.lane.b32.xlu0 %v326, 124
        %v417 = vpop.permute.xlu0 %416
        %418 = vrot.lane.b32.xlu0 %v335, 124
        %v419 = vpop.permute.xlu0 %418
        %420 = vrot.lane.b32.xlu0 %v327, 124
        %v421 = vpop.permute.xlu0 %420
        %422 = vrot.lane.b32.xlu0 %v336, 124
        %v423 = vpop.permute.xlu0 %422
        %424 = vrot.lane.b32.xlu0 %v328, 124
        %v425 = vpop.permute.xlu0 %424
        %vm426 = vcmask 1014784
        %v427 = vsel %vm426, %v417, %v419
        %v428 = vsel %vm426, %v419, %v421
        %v429 = vsel %vm426, %v421, %v423
        %v430 = vsel %vm426, %v423, %v425
        %435 = vst [vmem:[#allocation2 + $0x40] sm:$0xf] %v427
        %436 = vst [vmem:[#allocation2 + $0x48] sm:$0xf] %v428
        %437 = vst [vmem:[#allocation2 + $0x50] sm:$0xf] %v429
        %438 = vst [vmem:[#allocation2 + $0x58] sm:$0xf] %v430
        %439 = vrot.lane.b32.xlu0 %v344, 108
        %v440 = vpop.permute.xlu0 %439
        %441 = vrot.lane.b32.xlu0 %v326, 108
        %v442 = vpop.permute.xlu0 %441
        %443 = vrot.lane.b32.xlu0 %v345, 108
        %v444 = vpop.permute.xlu0 %443
        %445 = vrot.lane.b32.xlu0 %v327, 108
        %v446 = vpop.permute.xlu0 %445
        %447 = vrot.lane.b32.xlu0 %v346, 108
        %v448 = vpop.permute.xlu0 %447
        %vm449 = vcmask 883712
        %v450 = vsel %vm449, %v440, %v442
        %v451 = vsel %vm449, %v442, %v444
        %v452 = vsel %vm449, %v444, %v446
        %v453 = vsel %vm449, %v446, %v448
        %458 = vst [vmem:[#allocation2 + $0x40] sm:$0xf0] %v450
        %459 = vst [vmem:[#allocation2 + $0x48] sm:$0xf0] %v451
        %460 = vst [vmem:[#allocation2 + $0x50] sm:$0xf0] %v452
        %461 = vst [vmem:[#allocation2 + $0x58] sm:$0xf0] %v453
        %462 = vrot.lane.b32.xlu0 %v326, 107
        %v463 = vpop.permute.xlu0 %462
        %464 = vrot.lane.b32.xlu0 %v335, 107
        %v465 = vpop.permute.xlu0 %464
        %466 = vrot.lane.b32.xlu0 %v327, 107
        %v467 = vpop.permute.xlu0 %466
        %468 = vrot.lane.b32.xlu0 %v336, 107
        %v469 = vpop.permute.xlu0 %468
        %470 = vrot.lane.b32.xlu0 %v328, 107
        %v471 = vpop.permute.xlu0 %470
        %vm472 = vcmask 875520
        %v473 = vsel %vm472, %v463, %v465
        %v474 = vsel %vm472, %v465, %v467
        %v475 = vsel %vm472, %v467, %v469
        %v476 = vsel %vm472, %v469, %v471
        %481 = vst [vmem:[#allocation2 + $0x60] sm:$0xf] %v473
        %482 = vst [vmem:[#allocation2 + $0x68] sm:$0xf] %v474
        %483 = vst [vmem:[#allocation2 + $0x70] sm:$0xf] %v475
        %484 = vst [vmem:[#allocation2 + $0x78] sm:$0xf] %v476
        %485 = vrot.lane.b32.xlu0 %v344, 106
        %v486 = vpop.permute.xlu0 %485
        %487 = vrot.lane.b32.xlu0 %v326, 106
        %v488 = vpop.permute.xlu0 %487
        %489 = vrot.lane.b32.xlu0 %v345, 106
        %v490 = vpop.permute.xlu0 %489
        %491 = vrot.lane.b32.xlu0 %v327, 106
        %v492 = vpop.permute.xlu0 %491
        %493 = vrot.lane.b32.xlu0 %v346, 106
        %v494 = vpop.permute.xlu0 %493
        %vm495 = vcmask 867328
        %v496 = vsel %vm495, %v486, %v488
        %v497 = vsel %vm495, %v488, %v490
        %v498 = vsel %vm495, %v490, %v492
        %v499 = vsel %vm495, %v492, %v494
        %504 = vst [vmem:[#allocation2 + $0x60] sm:$0xf0] %v496
        %505 = vst [vmem:[#allocation2 + $0x68] sm:$0xf0] %v497
        %506 = vst [vmem:[#allocation2 + $0x70] sm:$0xf0] %v498
        %507 = vst [vmem:[#allocation2 + $0x78] sm:$0xf0] %v499
        %508 = vrot.lane.b32.xlu0 %v326, 105
        %v509 = vpop.permute.xlu0 %508
        %510 = vrot.lane.b32.xlu0 %v335, 105
        %v511 = vpop.permute.xlu0 %510
        %512 = vrot.lane.b32.xlu0 %v327, 105
        %v513 = vpop.permute.xlu0 %512
        %514 = vrot.lane.b32.xlu0 %v336, 105
        %v515 = vpop.permute.xlu0 %514
        %516 = vrot.lane.b32.xlu0 %v328, 105
        %v517 = vpop.permute.xlu0 %516
        %vm518 = vcmask 859136
        %v519 = vsel %vm518, %v509, %v511
        %v520 = vsel %vm518, %v511, %v513
        %v521 = vsel %vm518, %v513, %v515
        %v522 = vsel %vm518, %v515, %v517
        %527 = vst [vmem:[#allocation2 + $0x80] sm:$0xf] %v519
        %528 = vst [vmem:[#allocation2 + $0x88] sm:$0xf] %v520
        %529 = vst [vmem:[#allocation2 + $0x90] sm:$0xf] %v521
        %530 = vst [vmem:[#allocation2 + $0x98] sm:$0xf] %v522
        %531 = vrot.lane.b32.xlu0 %v344, 104
        %v532 = vpop.permute.xlu0 %531
        %533 = vrot.lane.b32.xlu0 %v326, 104
        %v534 = vpop.permute.xlu0 %533
        %535 = vrot.lane.b32.xlu0 %v345, 104
        %v536 = vpop.permute.xlu0 %535
        %537 = vrot.lane.b32.xlu0 %v327, 104
        %v538 = vpop.permute.xlu0 %537
        %539 = vrot.lane.b32.xlu0 %v346, 104
        %v540 = vpop.permute.xlu0 %539
        %vm541 = vcmask 850944
        %v542 = vsel %vm541, %v532, %v534
        %v543 = vsel %vm541, %v534, %v536
        %v544 = vsel %vm541, %v536, %v538
        %v545 = vsel %vm541, %v538, %v540
        %550 = vst [vmem:[#allocation2 + $0x80] sm:$0xf0] %v542
        %551 = vst [vmem:[#allocation2 + $0x88] sm:$0xf0] %v543
        %552 = vst [vmem:[#allocation2 + $0x90] sm:$0xf0] %v544
        %553 = vst [vmem:[#allocation2 + $0x98] sm:$0xf0] %v545
        %554 = vrot.lane.b32.xlu0 %v326, 88
        %v555 = vpop.permute.xlu0 %554
        %556 = vrot.lane.b32.xlu0 %v335, 88
        %v557 = vpop.permute.xlu0 %556
        %558 = vrot.lane.b32.xlu0 %v327, 88
        %v559 = vpop.permute.xlu0 %558
        %560 = vrot.lane.b32.xlu0 %v336, 88
        %v561 = vpop.permute.xlu0 %560
        %562 = vrot.lane.b32.xlu0 %v328, 88
        %v563 = vpop.permute.xlu0 %562
        %vm564 = vcmask 719872
        %v565 = vsel %vm564, %v555, %v557
        %v566 = vsel %vm564, %v557, %v559
        %v567 = vsel %vm564, %v559, %v561
        %v568 = vsel %vm564, %v561, %v563
        %573 = vst [vmem:[#allocation2 + $0xa0] sm:$0xf] %v565
        %574 = vst [vmem:[#allocation2 + $0xa8] sm:$0xf] %v566
        %575 = vst [vmem:[#allocation2 + $0xb0] sm:$0xf] %v567
        %576 = vst [vmem:[#allocation2 + $0xb8] sm:$0xf] %v568
        %577 = vrot.lane.b32.xlu0 %v344, 87
        %v578 = vpop.permute.xlu0 %577
        %579 = vrot.lane.b32.xlu0 %v326, 87
        %v580 = vpop.permute.xlu0 %579
        %581 = vrot.lane.b32.xlu0 %v345, 87
        %v582 = vpop.permute.xlu0 %581
        %583 = vrot.lane.b32.xlu0 %v327, 87
        %v584 = vpop.permute.xlu0 %583
        %585 = vrot.lane.b32.xlu0 %v346, 87
        %v586 = vpop.permute.xlu0 %585
        %vm587 = vcmask 711680
        %v588 = vsel %vm587, %v578, %v580
        %v589 = vsel %vm587, %v580, %v582
        %v590 = vsel %vm587, %v582, %v584
        %v591 = vsel %vm587, %v584, %v586
        %596 = vst [vmem:[#allocation2 + $0xa0] sm:$0xf0] %v588
        %597 = vst [vmem:[#allocation2 + $0xa8] sm:$0xf0] %v589
        %598 = vst [vmem:[#allocation2 + $0xb0] sm:$0xf0] %v590
        %599 = vst [vmem:[#allocation2 + $0xb8] sm:$0xf0] %v591
        %600 = vrot.lane.b32.xlu0 %v326, 86
        %v601 = vpop.permute.xlu0 %600
        %602 = vrot.lane.b32.xlu0 %v335, 86
        %v603 = vpop.permute.xlu0 %602
        %604 = vrot.lane.b32.xlu0 %v327, 86
        %v605 = vpop.permute.xlu0 %604
        %606 = vrot.lane.b32.xlu0 %v336, 86
        %v607 = vpop.permute.xlu0 %606
        %608 = vrot.lane.b32.xlu0 %v328, 86
        %v609 = vpop.permute.xlu0 %608
        %vm610 = vcmask 703488
        %v611 = vsel %vm610, %v601, %v603
        %v612 = vsel %vm610, %v603, %v605
        %v613 = vsel %vm610, %v605, %v607
        %v614 = vsel %vm610, %v607, %v609
        %619 = vst [vmem:[#allocation2 + $0xc0] sm:$0xf] %v611
        %620 = vst [vmem:[#allocation2 + $0xc8] sm:$0xf] %v612
        %621 = vst [vmem:[#allocation2 + $0xd0] sm:$0xf] %v613
        %622 = vst [vmem:[#allocation2 + $0xd8] sm:$0xf] %v614
        %623 = vrot.lane.b32.xlu0 %v344, 85
        %v624 = vpop.permute.xlu0 %623
        %625 = vrot.lane.b32.xlu0 %v326, 85
        %v626 = vpop.permute.xlu0 %625
        %627 = vrot.lane.b32.xlu0 %v345, 85
        %v628 = vpop.permute.xlu0 %627
        %629 = vrot.lane.b32.xlu0 %v327, 85
        %v630 = vpop.permute.xlu0 %629
        %631 = vrot.lane.b32.xlu0 %v346, 85
        %v632 = vpop.permute.xlu0 %631
        %vm633 = vcmask 695296
        %v634 = vsel %vm633, %v624, %v626
        %v635 = vsel %vm633, %v626, %v628
        %v636 = vsel %vm633, %v628, %v630
        %v637 = vsel %vm633, %v630, %v632
        %642 = vst [vmem:[#allocation2 + $0xc0] sm:$0xf0] %v634
        %643 = vst [vmem:[#allocation2 + $0xc8] sm:$0xf0] %v635
        %644 = vst [vmem:[#allocation2 + $0xd0] sm:$0xf0] %v636
        %645 = vst [vmem:[#allocation2 + $0xd8] sm:$0xf0] %v637
        %646 = vrot.lane.b32.xlu0 %v326, 84
        %v647 = vpop.permute.xlu0 %646
        %648 = vrot.lane.b32.xlu0 %v335, 84
        %v649 = vpop.permute.xlu0 %648
        %650 = vrot.lane.b32.xlu0 %v327, 84
        %v651 = vpop.permute.xlu0 %650
        %652 = vrot.lane.b32.xlu0 %v336, 84
        %v653 = vpop.permute.xlu0 %652
        %654 = vrot.lane.b32.xlu0 %v328, 84
        %v655 = vpop.permute.xlu0 %654
        %vm656 = vcmask 687104
        %v657 = vsel %vm656, %v647, %v649
        %v658 = vsel %vm656, %v649, %v651
        %v659 = vsel %vm656, %v651, %v653
        %v660 = vsel %vm656, %v653, %v655
        %665 = vst [vmem:[#allocation2 + $0xe0] sm:$0xf] %v657
        %666 = vst [vmem:[#allocation2 + $0xe8] sm:$0xf] %v658
        %667 = vst [vmem:[#allocation2 + $0xf0] sm:$0xf] %v659
        %668 = vst [vmem:[#allocation2 + $0xf8] sm:$0xf] %v660
        %669 = vrot.lane.b32.xlu0 %v344, 68
        %v670 = vpop.permute.xlu0 %669
        %671 = vrot.lane.b32.xlu0 %v326, 68
        %v672 = vpop.permute.xlu0 %671
        %673 = vrot.lane.b32.xlu0 %v345, 68
        %v674 = vpop.permute.xlu0 %673
        %675 = vrot.lane.b32.xlu0 %v327, 68
        %v676 = vpop.permute.xlu0 %675
        %677 = vrot.lane.b32.xlu0 %v346, 68
        %v678 = vpop.permute.xlu0 %677
        %vm679 = vcmask 556032
        %v680 = vsel %vm679, %v670, %v672
        %v681 = vsel %vm679, %v672, %v674
        %v682 = vsel %vm679, %v674, %v676
        %v683 = vsel %vm679, %v676, %v678
        %688 = vst [vmem:[#allocation2 + $0xe0] sm:$0xf0] %v680
        %689 = vst [vmem:[#allocation2 + $0xe8] sm:$0xf0] %v681
        %690 = vst [vmem:[#allocation2 + $0xf0] sm:$0xf0] %v682
        %691 = vst [vmem:[#allocation2 + $0xf8] sm:$0xf0] %v683
        %692 = vrot.lane.b32.xlu0 %v326, 67
        %v693 = vpop.permute.xlu0 %692
        %694 = vrot.lane.b32.xlu0 %v335, 67
        %v695 = vpop.permute.xlu0 %694
        %696 = vrot.lane.b32.xlu0 %v327, 67
        %v697 = vpop.permute.xlu0 %696
        %698 = vrot.lane.b32.xlu0 %v336, 67
        %v699 = vpop.permute.xlu0 %698
        %700 = vrot.lane.b32.xlu0 %v328, 67
        %v701 = vpop.permute.xlu0 %700
        %vm702 = vcmask 547840
        %v703 = vsel %vm702, %v693, %v695
        %v704 = vsel %vm702, %v695, %v697
        %v705 = vsel %vm702, %v697, %v699
        %v706 = vsel %vm702, %v699, %v701
        %711 = vst [vmem:[#allocation2 + $0x100] sm:$0xf] %v703
        %712 = vst [vmem:[#allocation2 + $0x108] sm:$0xf] %v704
        %713 = vst [vmem:[#allocation2 + $0x110] sm:$0xf] %v705
        %714 = vst [vmem:[#allocation2 + $0x118] sm:$0xf] %v706
        %715 = vrot.lane.b32.xlu0 %v344, 66
        %v716 = vpop.permute.xlu0 %715
        %717 = vrot.lane.b32.xlu0 %v326, 66
        %v718 = vpop.permute.xlu0 %717
        %719 = vrot.lane.b32.xlu0 %v345, 66
        %v720 = vpop.permute.xlu0 %719
        %721 = vrot.lane.b32.xlu0 %v327, 66
        %v722 = vpop.permute.xlu0 %721
        %723 = vrot.lane.b32.xlu0 %v346, 66
        %v724 = vpop.permute.xlu0 %723
        %vm725 = vcmask 539648
        %v726 = vsel %vm725, %v716, %v718
        %v727 = vsel %vm725, %v718, %v720
        %v728 = vsel %vm725, %v720, %v722
        %v729 = vsel %vm725, %v722, %v724
        %734 = vst [vmem:[#allocation2 + $0x100] sm:$0xf0] %v726
        %735 = vst [vmem:[#allocation2 + $0x108] sm:$0xf0] %v727
        %736 = vst [vmem:[#allocation2 + $0x110] sm:$0xf0] %v728
        %737 = vst [vmem:[#allocation2 + $0x118] sm:$0xf0] %v729
        %738 = vrot.lane.b32.xlu0 %v326, 65
        %v739 = vpop.permute.xlu0 %738
        %740 = vrot.lane.b32.xlu0 %v335, 65
        %v741 = vpop.permute.xlu0 %740
        %742 = vrot.lane.b32.xlu0 %v327, 65
        %v743 = vpop.permute.xlu0 %742
        %744 = vrot.lane.b32.xlu0 %v336, 65
        %v745 = vpop.permute.xlu0 %744
        %746 = vrot.lane.b32.xlu0 %v328, 65
        %v747 = vpop.permute.xlu0 %746
        %vm748 = vcmask 531456
        %v749 = vsel %vm748, %v739, %v741
        %v750 = vsel %vm748, %v741, %v743
        %v751 = vsel %vm748, %v743, %v745
        %v752 = vsel %vm748, %v745, %v747
        %757 = vst [vmem:[#allocation2 + $0x120] sm:$0xf] %v749
        %758 = vst [vmem:[#allocation2 + $0x128] sm:$0xf] %v750
        %759 = vst [vmem:[#allocation2 + $0x130] sm:$0xf] %v751
        %760 = vst [vmem:[#allocation2 + $0x138] sm:$0xf] %v752
        %761 = vrot.lane.b32.xlu0 %v344, 64
        %v762 = vpop.permute.xlu0 %761
        %763 = vrot.lane.b32.xlu0 %v326, 64
        %v764 = vpop.permute.xlu0 %763
        %765 = vrot.lane.b32.xlu0 %v345, 64
        %v766 = vpop.permute.xlu0 %765
        %767 = vrot.lane.b32.xlu0 %v327, 64
        %v768 = vpop.permute.xlu0 %767
        %769 = vrot.lane.b32.xlu0 %v346, 64
        %v770 = vpop.permute.xlu0 %769
        %vm771 = vcmask 523264
        %v772 = vsel %vm771, %v762, %v764
        %v773 = vsel %vm771, %v764, %v766
        %v774 = vsel %vm771, %v766, %v768
        %v775 = vsel %vm771, %v768, %v770
        %780 = vst [vmem:[#allocation2 + $0x120] sm:$0xf0] %v772
        %781 = vst [vmem:[#allocation2 + $0x128] sm:$0xf0] %v773
        %782 = vst [vmem:[#allocation2 + $0x130] sm:$0xf0] %v774
        %783 = vst [vmem:[#allocation2 + $0x138] sm:$0xf0] %v775
        %784 = vrot.lane.b32.xlu0 %v326, 48
        %v785 = vpop.permute.xlu0 %784
        %786 = vrot.lane.b32.xlu0 %v335, 48
        %v787 = vpop.permute.xlu0 %786
        %788 = vrot.lane.b32.xlu0 %v327, 48
        %v789 = vpop.permute.xlu0 %788
        %790 = vrot.lane.b32.xlu0 %v336, 48
        %v791 = vpop.permute.xlu0 %790
        %792 = vrot.lane.b32.xlu0 %v328, 48
        %v793 = vpop.permute.xlu0 %792
        %vm794 = vcmask 392192
        %v795 = vsel %vm794, %v785, %v787
        %v796 = vsel %vm794, %v787, %v789
        %v797 = vsel %vm794, %v789, %v791
        %v798 = vsel %vm794, %v791, %v793
        %803 = vst [vmem:[#allocation2 + $0x140] sm:$0xf] %v795
        %804 = vst [vmem:[#allocation2 + $0x148] sm:$0xf] %v796
        %805 = vst [vmem:[#allocation2 + $0x150] sm:$0xf] %v797
        %806 = vst [vmem:[#allocation2 + $0x158] sm:$0xf] %v798
        %807 = vrot.lane.b32.xlu0 %v344, 47
        %v808 = vpop.permute.xlu0 %807
        %809 = vrot.lane.b32.xlu0 %v326, 47
        %v810 = vpop.permute.xlu0 %809
        %811 = vrot.lane.b32.xlu0 %v345, 47
        %v812 = vpop.permute.xlu0 %811
        %813 = vrot.lane.b32.xlu0 %v327, 47
        %v814 = vpop.permute.xlu0 %813
        %815 = vrot.lane.b32.xlu0 %v346, 47
        %v816 = vpop.permute.xlu0 %815
        %vm817 = vcmask 384000
        %v818 = vsel %vm817, %v808, %v810
        %v819 = vsel %vm817, %v810, %v812
        %v820 = vsel %vm817, %v812, %v814
        %v821 = vsel %vm817, %v814, %v816
        %826 = vst [vmem:[#allocation2 + $0x140] sm:$0xf0] %v818
        %827 = vst [vmem:[#allocation2 + $0x148] sm:$0xf0] %v819
        %828 = vst [vmem:[#allocation2 + $0x150] sm:$0xf0] %v820
        %829 = vst [vmem:[#allocation2 + $0x158] sm:$0xf0] %v821
        %830 = vrot.lane.b32.xlu0 %v326, 46
        %v831 = vpop.permute.xlu0 %830
        %832 = vrot.lane.b32.xlu0 %v335, 46
        %v833 = vpop.permute.xlu0 %832
        %834 = vrot.lane.b32.xlu0 %v327, 46
        %v835 = vpop.permute.xlu0 %834
        %836 = vrot.lane.b32.xlu0 %v336, 46
        %v837 = vpop.permute.xlu0 %836
        %838 = vrot.lane.b32.xlu0 %v328, 46
        %v839 = vpop.permute.xlu0 %838
        %vm840 = vcmask 375808
        %v841 = vsel %vm840, %v831, %v833
        %v842 = vsel %vm840, %v833, %v835
        %v843 = vsel %vm840, %v835, %v837
        %v844 = vsel %vm840, %v837, %v839
        %849 = vst [vmem:[#allocation2 + $0x160] sm:$0xf] %v841
        %850 = vst [vmem:[#allocation2 + $0x168] sm:$0xf] %v842
        %851 = vst [vmem:[#allocation2 + $0x170] sm:$0xf] %v843
        %852 = vst [vmem:[#allocation2 + $0x178] sm:$0xf] %v844
        %853 = vrot.lane.b32.xlu0 %v344, 45
        %v854 = vpop.permute.xlu0 %853
        %855 = vrot.lane.b32.xlu0 %v326, 45
        %v856 = vpop.permute.xlu0 %855
        %857 = vrot.lane.b32.xlu0 %v345, 45
        %v858 = vpop.permute.xlu0 %857
        %859 = vrot.lane.b32.xlu0 %v327, 45
        %v860 = vpop.permute.xlu0 %859
        %861 = vrot.lane.b32.xlu0 %v346, 45
        %v862 = vpop.permute.xlu0 %861
        %vm863 = vcmask 367616
        %v864 = vsel %vm863, %v854, %v856
        %v865 = vsel %vm863, %v856, %v858
        %v866 = vsel %vm863, %v858, %v860
        %v867 = vsel %vm863, %v860, %v862
        %872 = vst [vmem:[#allocation2 + $0x160] sm:$0xf0] %v864
        %873 = vst [vmem:[#allocation2 + $0x168] sm:$0xf0] %v865
        %874 = vst [vmem:[#allocation2 + $0x170] sm:$0xf0] %v866
        %875 = vst [vmem:[#allocation2 + $0x178] sm:$0xf0] %v867
        %876 = vrot.lane.b32.xlu0 %v326, 44
        %v877 = vpop.permute.xlu0 %876
        %878 = vrot.lane.b32.xlu0 %v335, 44
        %v879 = vpop.permute.xlu0 %878
        %880 = vrot.lane.b32.xlu0 %v327, 44
        %v881 = vpop.permute.xlu0 %880
        %882 = vrot.lane.b32.xlu0 %v336, 44
        %v883 = vpop.permute.xlu0 %882
        %884 = vrot.lane.b32.xlu0 %v328, 44
        %v885 = vpop.permute.xlu0 %884
        %vm886 = vcmask 359424
        %v887 = vsel %vm886, %v877, %v879
        %v888 = vsel %vm886, %v879, %v881
        %v889 = vsel %vm886, %v881, %v883
        %v890 = vsel %vm886, %v883, %v885
        %895 = vst [vmem:[#allocation2 + $0x180] sm:$0xf] %v887
        %896 = vst [vmem:[#allocation2 + $0x188] sm:$0xf] %v888
        %897 = vst [vmem:[#allocation2 + $0x190] sm:$0xf] %v889
        %898 = vst [vmem:[#allocation2 + $0x198] sm:$0xf] %v890
        %v899 = vld [vmem:[#allocation2] sm:$0xff]
        %v900 = vld [vmem:[#allocation2 + $0x8] sm:$0xff]
        %v901 = vld [vmem:[#allocation2 + $0x10] sm:$0xff]
        %v902 = vld [vmem:[#allocation2 + $0x18] sm:$0xff]
        %v903 = vld [vmem:[#allocation2 + $0x20] sm:$0xff]
        %v904 = vld [vmem:[#allocation2 + $0x28] sm:$0xff]
        %v905 = vld [vmem:[#allocation2 + $0x30] sm:$0xff]
        %v906 = vld [vmem:[#allocation2 + $0x38] sm:$0xff]
        %v907 = vld [vmem:[#allocation2 + $0x40] sm:$0xff]
        %v908 = vld [vmem:[#allocation2 + $0x48] sm:$0xff]
        %v909 = vld [vmem:[#allocation2 + $0x50] sm:$0xff]
        %v910 = vld [vmem:[#allocation2 + $0x58] sm:$0xff]
        %v911 = vld [vmem:[#allocation2 + $0x60] sm:$0xff]
        %v912 = vld [vmem:[#allocation2 + $0x68] sm:$0xff]
        %v913 = vld [vmem:[#allocation2 + $0x70] sm:$0xff]
        %v914 = vld [vmem:[#allocation2 + $0x78] sm:$0xff]
        %v915 = vld [vmem:[#allocation2 + $0x80] sm:$0xff]
        %v916 = vld [vmem:[#allocation2 + $0x88] sm:$0xff]
        %v917 = vld [vmem:[#allocation2 + $0x90] sm:$0xff]
        %v918 = vld [vmem:[#allocation2 + $0x98] sm:$0xff]
        %v919 = vld [vmem:[#allocation2 + $0xa0] sm:$0xff]
        %v920 = vld [vmem:[#allocation2 + $0xa8] sm:$0xff]
        %v921 = vld [vmem:[#allocation2 + $0xb0] sm:$0xff]
        %v922 = vld [vmem:[#allocation2 + $0xb8] sm:$0xff]
        %v923 = vld [vmem:[#allocation2 + $0xc0] sm:$0xff]
        %v924 = vld [vmem:[#allocation2 + $0xc8] sm:$0xff]
        %v925 = vld [vmem:[#allocation2 + $0xd0] sm:$0xff]
        %v926 = vld [vmem:[#allocation2 + $0xd8] sm:$0xff]
        %v927 = vld [vmem:[#allocation2 + $0xe0] sm:$0xff]
        %v928 = vld [vmem:[#allocation2 + $0xe8] sm:$0xff]
        %v929 = vld [vmem:[#allocation2 + $0xf0] sm:$0xff]
        %v930 = vld [vmem:[#allocation2 + $0xf8] sm:$0xff]
        %v931 = vld [vmem:[#allocation2 + $0x100] sm:$0xff]
        %v932 = vld [vmem:[#allocation2 + $0x108] sm:$0xff]
        %v933 = vld [vmem:[#allocation2 + $0x110] sm:$0xff]
        %v934 = vld [vmem:[#allocation2 + $0x118] sm:$0xff]
        %v935 = vld [vmem:[#allocation2 + $0x120] sm:$0xff]
        %v936 = vld [vmem:[#allocation2 + $0x128] sm:$0xff]
        %v937 = vld [vmem:[#allocation2 + $0x130] sm:$0xff]
        %v938 = vld [vmem:[#allocation2 + $0x138] sm:$0xff]
        %v939 = vld [vmem:[#allocation2 + $0x140] sm:$0xff]
        %v940 = vld [vmem:[#allocation2 + $0x148] sm:$0xff]
        %v941 = vld [vmem:[#allocation2 + $0x150] sm:$0xff]
        %v942 = vld [vmem:[#allocation2 + $0x158] sm:$0xff]
        %v943 = vld [vmem:[#allocation2 + $0x160] sm:$0xff]
        %v944 = vld [vmem:[#allocation2 + $0x168] sm:$0xff]
        %v945 = vld [vmem:[#allocation2 + $0x170] sm:$0xff]
        %v946 = vld [vmem:[#allocation2 + $0x178] sm:$0xff]
        %v947 = vld [vmem:[#allocation2 + $0x180] sm:$0xff]
        %v948 = vld [vmem:[#allocation2 + $0x188] sm:$0xff]
        %v949 = vld [vmem:[#allocation2 + $0x190] sm:$0xff]
        %v950 = vld [vmem:[#allocation2 + $0x198] sm:$0xff]
        %v951 = vld [vmem:[%s1] sm:$0xf]
        %v952 = vpack.c.bf16 %v903, %v899
        %v953 = vpack.c.bf16 %v904, %v900
        %v954 = vpack.c.bf16 %v905, %v901
        %v955 = vpack.c.bf16 %v906, %v902
        %v956 = vpack.c.bf16 %v911, %v907
        %v957 = vpack.c.bf16 %v912, %v908
        %v958 = vpack.c.bf16 %v913, %v909
        %v959 = vpack.c.bf16 %v914, %v910
        %v960 = vpack.c.bf16 %v919, %v915
        %v961 = vpack.c.bf16 %v920, %v916
        %v962 = vpack.c.bf16 %v921, %v917
        %v963 = vpack.c.bf16 %v922, %v918
        %v964 = vpack.c.bf16 %v927, %v923
        %v965 = vpack.c.bf16 %v928, %v924
        %v966 = vpack.c.bf16 %v929, %v925
        %v967 = vpack.c.bf16 %v930, %v926
        %v968 = vpack.c.bf16 %v935, %v931
        %v969 = vpack.c.bf16 %v936, %v932
        %v970 = vpack.c.bf16 %v937, %v933
        %v971 = vpack.c.bf16 %v938, %v934
        %v972 = vpack.c.bf16 %v943, %v939
        %v973 = vpack.c.bf16 %v944, %v940
        %v974 = vpack.c.bf16 %v945, %v941
        %v975 = vpack.c.bf16 %v946, %v942
        %v976 = vpack.c.bf16 %v947, %v947
        %v977 = vpack.c.bf16 %v948, %v948
        %v978 = vpack.c.bf16 %v949, %v949
        %v979 = vpack.c.bf16 %v950, %v950
        %v980 = vld [vmem:[%s2] sm:$0xff]
        %982 = vset.pattern.permute.xlu0 0
        %983 = vperm.xlu0 %982, %v980
        %v984 = vpop.permute.xlu0 %983
        %v987 = vsel %vm541, %v951, 0
        %vm989 = vcmask 1043456
        %v991 = vsel %vm989, %v976, 0
        %v994 = vsel %vm989, %v977, 0
        %v997 = vsel %vm989, %v978, 0
        %v1000 = vsel %vm989, %v979, 0
        %1002 = vmatprep.subr.bf16.mxu0 %v953
        %1003 = vmatpush1.bf16.msra.mxu0 %v952
        %1004 = vmatprep.subr.bf16.mxu0 %v957
        %1005 = vmatpush1.bf16.msra.mxu0 %v956
        %1006 = vmatprep.subr.bf16.mxu0 %v961
        %1007 = vmatpush1.bf16.msra.mxu0 %v960
        %1008 = vmatprep.subr.bf16.mxu0 %v965
        %1009 = vmatpush1.bf16.msra.mxu0 %v964
        %1010 = vmatprep.subr.bf16.mxu0 %v969
        %1011 = vmatpush1.bf16.msra.mxu0 %v968
        %1012 = vmatprep.subr.bf16.mxu0 %v973
        %1013 = vmatpush1.bf16.msra.mxu0 %v972
        %1014 = vmatprep.subr.bf16.mxu0 %v994
        %1015 = vmatpush1.bf16.msra.mxu0 %v991
        %1016 = vmatprep.subr.bf16.mxu0 0
        %1017 = vmatpush1.bf16.msra.mxu0 0
        %1018 = vmatprep.subr.bf16.mxu0 0
        %1019 = vmatpush1.bf16.msra.mxu0 0
        %1020 = vmatprep.subr.bf16.mxu0 0
        %1021 = vmatpush1.bf16.msra.mxu0 0
        %1022 = vmatprep.subr.bf16.mxu0 0
        %1023 = vmatpush1.bf16.msra.mxu0 0
        %1024 = vmatprep.subr.bf16.mxu0 0
        %1025 = vmatpush1.bf16.msra.mxu0 0
        %1026 = vmatprep.subr.bf16.mxu0 0
        %1027 = vmatpush1.bf16.msra.mxu0 0
        %1028 = vmatprep.subr.bf16.mxu0 0
        %1029 = vmatpush1.bf16.msra.mxu0 0
        %1030 = vmatprep.subr.bf16.mxu0 0
        %1031 = vmatpush1.bf16.msra.mxu0 0
        %1032 = vmatprep.subr.bf16.mxu0 0
        %1033 = vmatpush1.bf16.msra.mxu0 0
        %1034 = vmatprep.mubr.bf16.mxu0 0
        %1035 = vmatmul.mubr.bf16.gmra.mrb[0].mxu0 %v987
        %v1036 = vpop.f32.mrb[0].mxu0
        %v1037 = vadd.f32 %v984, %v1036
        %v1038 = vpop.f32.mrb[0].mxu0
        %v1039 = vadd.f32 %v984, %v1038
        %v1040 = vpop.f32.mrb[0].mxu0
        %v1041 = vpop.f32.mrb[0].mxu0
        %1042 = vdwg.mxu0
        %1043 = vmatprep.subr.bf16.mxu0 %v955
        %1044 = vmatpush1.bf16.msra.mxu0 %v954
        %1045 = vmatprep.subr.bf16.mxu0 %v959
        %1046 = vmatpush1.bf16.msra.mxu0 %v958
        %1047 = vmatprep.subr.bf16.mxu0 %v963
        %1048 = vmatpush1.bf16.msra.mxu0 %v962
        %1049 = vmatprep.subr.bf16.mxu0 %v967
        %1050 = vmatpush1.bf16.msra.mxu0 %v966
        %1051 = vmatprep.subr.bf16.mxu0 %v971
        %1052 = vmatpush1.bf16.msra.mxu0 %v970
        %1053 = vmatprep.subr.bf16.mxu0 %v975
        %1054 = vmatpush1.bf16.msra.mxu0 %v974
        %1055 = vmatprep.subr.bf16.mxu0 %v1000
        %1056 = vmatpush1.bf16.msra.mxu0 %v997
        %1057 = vmatprep.subr.bf16.mxu0 0
        %1058 = vmatpush1.bf16.msra.mxu0 0
        %1059 = vmatprep.subr.bf16.mxu0 0
        %1060 = vmatpush1.bf16.msra.mxu0 0
        %1061 = vmatprep.subr.bf16.mxu0 0
        %1062 = vmatpush1.bf16.msra.mxu0 0
        %1063 = vmatprep.subr.bf16.mxu0 0
        %1064 = vmatpush1.bf16.msra.mxu0 0
        %1065 = vmatprep.subr.bf16.mxu0 0
        %1066 = vmatpush1.bf16.msra.mxu0 0
        %1067 = vmatprep.subr.bf16.mxu0 0
        %1068 = vmatpush1.bf16.msra.mxu0 0
        %1069 = vmatprep.subr.bf16.mxu0 0
        %1070 = vmatpush1.bf16.msra.mxu0 0
        %1071 = vmatprep.subr.bf16.mxu0 0
        %1072 = vmatpush1.bf16.msra.mxu0 0
        %1073 = vmatprep.subr.bf16.mxu0 0
        %1074 = vmatpush1.bf16.msra.mxu0 0
        %1075 = vmatprep.mubr.bf16.mxu0 0
        %1076 = vmatmul.mubr.bf16.gmra.mrb[0].mxu0 %v987
        %v1077 = vpop.f32.mrb[0].mxu0
        %v1078 = vadd.f32 %v984, %v1077
        %v1079 = vpop.f32.mrb[0].mxu0
        %v1080 = vadd.f32 %v984, %v1079
        %v1081 = vpop.f32.mrb[0].mxu0
        %v1082 = vpop.f32.mrb[0].mxu0
        %1083 = vdwg.mxu0
        %v1084 = vld [vmem:[#allocation6] sm:$0xf]
        %v1085 = vmul.f32 %v899, %v899
        %v1086 = vmul.f32 %v900, %v900
        %v1087 = vmul.f32 %v901, %v901
        %v1088 = vmul.f32 %v902, %v902
        %v1089 = vmul.f32 %v903, %v903
        %v1090 = vmul.f32 %v904, %v904
        %v1091 = vmul.f32 %v905, %v905
        %v1092 = vmul.f32 %v906, %v906
        %v1093 = vmul.f32 %v907, %v907
        %v1094 = vmul.f32 %v908, %v908
        %v1095 = vmul.f32 %v909, %v909
        %v1096 = vmul.f32 %v910, %v910
        %v1097 = vmul.f32 %v911, %v911
        %v1098 = vmul.f32 %v912, %v912
        %v1099 = vmul.f32 %v913, %v913
        %v1100 = vmul.f32 %v914, %v914
        %v1101 = vmul.f32 %v915, %v915
        %v1102 = vmul.f32 %v916, %v916
        %v1103 = vmul.f32 %v917, %v917
        %v1104 = vmul.f32 %v918, %v918
        %v1105 = vmul.f32 %v919, %v919
        %v1106 = vmul.f32 %v920, %v920
        %v1107 = vmul.f32 %v921, %v921
        %v1108 = vmul.f32 %v922, %v922
        %v1109 = vmul.f32 %v923, %v923
        %v1110 = vmul.f32 %v924, %v924
        %v1111 = vmul.f32 %v925, %v925
        %v1112 = vmul.f32 %v926, %v926
        %v1113 = vmul.f32 %v927, %v927
        %v1114 = vmul.f32 %v928, %v928
        %v1115 = vmul.f32 %v929, %v929
        %v1116 = vmul.f32 %v930, %v930
        %v1117 = vmul.f32 %v931, %v931
        %v1118 = vmul.f32 %v932, %v932
        %v1119 = vmul.f32 %v933, %v933
        %v1120 = vmul.f32 %v934, %v934
        %v1121 = vmul.f32 %v935, %v935
        %v1122 = vmul.f32 %v936, %v936
        %v1123 = vmul.f32 %v937, %v937
        %v1124 = vmul.f32 %v938, %v938
        %v1125 = vmul.f32 %v939, %v939
        %v1126 = vmul.f32 %v940, %v940
        %v1127 = vmul.f32 %v941, %v941
        %v1128 = vmul.f32 %v942, %v942
        %v1129 = vmul.f32 %v943, %v943
        %v1130 = vmul.f32 %v944, %v944
        %v1131 = vmul.f32 %v945, %v945
        %v1132 = vmul.f32 %v946, %v946
        %v1133 = vmul.f32 %v947, %v947
        %v1134 = vmul.f32 %v948, %v948
        %v1135 = vmul.f32 %v949, %v949
        %v1136 = vmul.f32 %v950, %v950
        %v1137 = vpack.c.bf16 %v1089, %v1085
        %v1138 = vpack.c.bf16 %v1090, %v1086
        %v1139 = vpack.c.bf16 %v1091, %v1087
        %v1140 = vpack.c.bf16 %v1092, %v1088
        %v1141 = vpack.c.bf16 %v1097, %v1093
        %v1142 = vpack.c.bf16 %v1098, %v1094
        %v1143 = vpack.c.bf16 %v1099, %v1095
        %v1144 = vpack.c.bf16 %v1100, %v1096
        %v1145 = vpack.c.bf16 %v1105, %v1101
        %v1146 = vpack.c.bf16 %v1106, %v1102
        %v1147 = vpack.c.bf16 %v1107, %v1103
        %v1148 = vpack.c.bf16 %v1108, %v1104
        %v1149 = vpack.c.bf16 %v1113, %v1109
        %v1150 = vpack.c.bf16 %v1114, %v1110
        %v1151 = vpack.c.bf16 %v1115, %v1111
        %v1152 = vpack.c.bf16 %v1116, %v1112
        %v1153 = vpack.c.bf16 %v1121, %v1117
        %v1154 = vpack.c.bf16 %v1122, %v1118
        %v1155 = vpack.c.bf16 %v1123, %v1119
        %v1156 = vpack.c.bf16 %v1124, %v1120
        %v1157 = vpack.c.bf16 %v1129, %v1125
        %v1158 = vpack.c.bf16 %v1130, %v1126
        %v1159 = vpack.c.bf16 %v1131, %v1127
        %v1160 = vpack.c.bf16 %v1132, %v1128
        %v1161 = vpack.c.bf16 %v1133, %v1133
        %v1162 = vpack.c.bf16 %v1134, %v1134
        %v1163 = vpack.c.bf16 %v1135, %v1135
        %v1164 = vpack.c.bf16 %v1136, %v1136
        %v1165 = vld [vmem:[%s4] sm:$0xff]
        %1167 = vset.pattern.permute.xlu0 0
        %1168 = vperm.xlu0 %1167, %v1165
        %v1169 = vpop.permute.xlu0 %1168
        %v1172 = vsel %vm541, %v1084, 0
        %v1175 = vsel %vm989, %v1161, 0
        %v1178 = vsel %vm989, %v1162, 0
        %v1181 = vsel %vm989, %v1163, 0
        %v1184 = vsel %vm989, %v1164, 0
        %1186 = vmatprep.subr.bf16.mxu0 %v1138
        %1187 = vmatpush1.bf16.msra.mxu0 %v1137
        %1188 = vmatprep.subr.bf16.mxu0 %v1142
        %1189 = vmatpush1.bf16.msra.mxu0 %v1141
        %1190 = vmatprep.subr.bf16.mxu0 %v1146
        %1191 = vmatpush1.bf16.msra.mxu0 %v1145
        %1192 = vmatprep.subr.bf16.mxu0 %v1150
        %1193 = vmatpush1.bf16.msra.mxu0 %v1149
        %1194 = vmatprep.subr.bf16.mxu0 %v1154
        %1195 = vmatpush1.bf16.msra.mxu0 %v1153
        %1196 = vmatprep.subr.bf16.mxu0 %v1158
        %1197 = vmatpush1.bf16.msra.mxu0 %v1157
        %1198 = vmatprep.subr.bf16.mxu0 %v1178
        %1199 = vmatpush1.bf16.msra.mxu0 %v1175
        %1200 = vmatprep.subr.bf16.mxu0 0
        %1201 = vmatpush1.bf16.msra.mxu0 0
        %1202 = vmatprep.subr.bf16.mxu0 0
        %1203 = vmatpush1.bf16.msra.mxu0 0
        %1204 = vmatprep.subr.bf16.mxu0 0
        %1205 = vmatpush1.bf16.msra.mxu0 0
        %1206 = vmatprep.subr.bf16.mxu0 0
        %1207 = vmatpush1.bf16.msra.mxu0 0
        %1208 = vmatprep.subr.bf16.mxu0 0
        %1209 = vmatpush1.bf16.msra.mxu0 0
        %1210 = vmatprep.subr.bf16.mxu0 0
        %1211 = vmatpush1.bf16.msra.mxu0 0
        %1212 = vmatprep.subr.bf16.mxu0 0
        %1213 = vmatpush1.bf16.msra.mxu0 0
        %1214 = vmatprep.subr.bf16.mxu0 0
        %1215 = vmatpush1.bf16.msra.mxu0 0
        %1216 = vmatprep.subr.bf16.mxu0 0
        %1217 = vmatpush1.bf16.msra.mxu0 0
        %1218 = vmatprep.mubr.bf16.mxu0 0
        %1219 = vmatmul.mubr.bf16.gmra.mrb[0].mxu0 %v1172
        %v1220 = vpop.f32.mrb[0].mxu0
        %v1221 = vadd.f32 %v1169, %v1220
        %v1222 = vpop.f32.mrb[0].mxu0
        %v1223 = vadd.f32 %v1169, %v1222
        %v1224 = vpop.f32.mrb[0].mxu0
        %v1225 = vpop.f32.mrb[0].mxu0
        %1226 = vdwg.mxu0
        %1227 = vmatprep.subr.bf16.mxu0 %v1140
        %1228 = vmatpush1.bf16.msra.mxu0 %v1139
        %1229 = vmatprep.subr.bf16.mxu0 %v1144
        %1230 = vmatpush1.bf16.msra.mxu0 %v1143
        %1231 = vmatprep.subr.bf16.mxu0 %v1148
        %1232 = vmatpush1.bf16.msra.mxu0 %v1147
        %1233 = vmatprep.subr.bf16.mxu0 %v1152
        %1234 = vmatpush1.bf16.msra.mxu0 %v1151
        %1235 = vmatprep.subr.bf16.mxu0 %v1156
        %1236 = vmatpush1.bf16.msra.mxu0 %v1155
        %1237 = vmatprep.subr.bf16.mxu0 %v1160
        %1238 = vmatpush1.bf16.msra.mxu0 %v1159
        %1239 = vmatprep.subr.bf16.mxu0 %v1184
        %1240 = vmatpush1.bf16.msra.mxu0 %v1181
        %1241 = vmatprep.subr.bf16.mxu0 0
        %1242 = vmatpush1.bf16.msra.mxu0 0
        %1243 = vmatprep.subr.bf16.mxu0 0
        %1244 = vmatpush1.bf16.msra.mxu0 0
        %1245 = vmatprep.subr.bf16.mxu0 0
        %1246 = vmatpush1.bf16.msra.mxu0 0
        %1247 = vmatprep.subr.bf16.mxu0 0
        %1248 = vmatpush1.bf16.msra.mxu0 0
        %1249 = vmatprep.subr.bf16.mxu0 0
        %1250 = vmatpush1.bf16.msra.mxu0 0
        %1251 = vmatprep.subr.bf16.mxu0 0
        %1252 = vmatpush1.bf16.msra.mxu0 0
        %1253 = vmatprep.subr.bf16.mxu0 0
        %1254 = vmatpush1.bf16.msra.mxu0 0
        %1255 = vmatprep.subr.bf16.mxu0 0
        %1256 = vmatpush1.bf16.msra.mxu0 0
        %1257 = vmatprep.subr.bf16.mxu0 0
        %1258 = vmatpush1.bf16.msra.mxu0 0
        %1259 = vmatprep.mubr.bf16.mxu0 0
        %1260 = vmatmul.mubr.bf16.gmra.mrb[0].mxu0 %v1172
        %v1261 = vpop.f32.mrb[0].mxu0
        %v1262 = vadd.f32 %v1169, %v1261
        %v1263 = vpop.f32.mrb[0].mxu0
        %v1264 = vadd.f32 %v1169, %v1263
        %v1265 = vpop.f32.mrb[0].mxu0
        %v1266 = vpop.f32.mrb[0].mxu0
        %1267 = vdwg.mxu0
        %v1268 = vxor.u32 %v1037, 2147483648
        %v1269 = vxor.u32 %v1039, 2147483648
        %v1270 = vxor.u32 %v1078, 2147483648
        %v1271 = vxor.u32 %v1080, 2147483648
        %v1272 = vmul.f32 %v1268, 1.442695
        %v1273 = vpow.pop %v1272
        %v1274 = vmul.f32 %v1269, 1.442695
        %v1275 = vpow.pop %v1274
        %v1276 = vmul.f32 %v1270, 1.442695
        %v1277 = vpow.pop %v1276
        %v1278 = vmul.f32 %v1271, 1.442695
        %v1279 = vpow.pop %v1278
        %v1280 = vadd.f32 %v1273, 1.0
        %v1281 = vadd.f32 %v1275, 1.0
        %v1282 = vadd.f32 %v1277, 1.0
        %v1283 = vadd.f32 %v1279, 1.0
        %v1284 = vrcp.pop %v1280
        %v1285 = vmul.f32 1.0, %v1284
        %v1286 = vrcp.pop %v1281
        %v1287 = vmul.f32 1.0, %v1286
        %v1288 = vrcp.pop %v1282
        %v1289 = vmul.f32 1.0, %v1288
        %v1290 = vrcp.pop %v1283
        %v1291 = vmul.f32 1.0, %v1290
        %v1292 = vand.u32 2147483647, %v1221
        %v1293 = vand.u32 2147483647, %v1223
        %v1294 = vand.u32 2147483647, %v1262
        %v1295 = vand.u32 2147483647, %v1264
        %v1296 = vsub.f32 0.0, %v1292
        %v1297 = vsub.f32 0.0, %v1293
        %v1298 = vsub.f32 0.0, %v1294
        %v1299 = vsub.f32 0.0, %v1295
        %v1300 = vmul.f32 %v1296, 1.442695
        %v1301 = vpow.pop %v1300
        %v1302 = vmul.f32 %v1297, 1.442695
        %v1303 = vpow.pop %v1302
        %v1304 = vmul.f32 %v1298, 1.442695
        %v1305 = vpow.pop %v1304
        %v1306 = vmul.f32 %v1299, 1.442695
        %v1307 = vpow.pop %v1306
        %v1308 = vadd.f32 %v1301, 1.0
        %v1309 = vadd.f32 %v1303, 1.0
        %v1310 = vadd.f32 %v1305, 1.0
        %v1311 = vadd.f32 %v1307, 1.0
        %v1312 = vrcp.pop %v1308
        %v1313 = vmul.f32 1.0, %v1312
        %v1314 = vrcp.pop %v1309
        %v1315 = vmul.f32 1.0, %v1314
        %v1316 = vrcp.pop %v1310
        %v1317 = vmul.f32 1.0, %v1316
        %v1318 = vrcp.pop %v1311
        %v1319 = vmul.f32 1.0, %v1318
        %vm1320 = vcmp.ge.f32.partialorder %v1221, 0.0
        %vm1321 = vcmp.ge.f32.partialorder %v1223, 0.0
        %vm1322 = vcmp.ge.f32.partialorder %v1262, 0.0
        %vm1323 = vcmp.ge.f32.partialorder %v1264, 0.0
        %v1324 = vmul.f32 %v1301, %v1313
        %v1325 = vmul.f32 %v1303, %v1315
        %v1326 = vmul.f32 %v1305, %v1317
        %v1327 = vmul.f32 %v1307, %v1319
        %v1328 = vsel %vm1320, %v1313, %v1324
        %v1329 = vsel %vm1321, %v1315, %v1325
        %v1330 = vsel %vm1322, %v1317, %v1326
        %v1331 = vsel %vm1323, %v1319, %v1327
        %v1332 = vmin.f32 %v1221, 0.0
        %v1333 = vmin.f32 %v1223, 0.0
        %v1334 = vmin.f32 %v1262, 0.0
        %v1335 = vmin.f32 %v1264, 0.0
        %v1336 = vadd.f32 %v1301, 1.0
        %v1337 = vlog2.pop %v1336
        %v1338 = vmul.f32 %v1337, 0.6931472
        %v1339 = vmul.f32 -0.5, %v1301
        %v1340 = vadd.f32 %v1339, 1.0
        %v1341 = vmul.f32 %v1340, %v1301
        %v1342 = vand.u32 2147483647, %v1301
        %vm1343 = vcmp.lt.f32.partialorder %v1342, 0.0004427343
        %v1344 = vsel %vm1343, %v1341, %v1338
        %v1345 = vadd.f32 %v1303, 1.0
        %v1346 = vlog2.pop %v1345
        %v1347 = vmul.f32 %v1346, 0.6931472
        %v1348 = vmul.f32 -0.5, %v1303
        %v1349 = vadd.f32 %v1348, 1.0
        %v1350 = vmul.f32 %v1349, %v1303
        %v1351 = vand.u32 2147483647, %v1303
        %vm1352 = vcmp.lt.f32.partialorder %v1351, 0.0004427343
        %v1353 = vsel %vm1352, %v1350, %v1347
        %v1354 = vadd.f32 %v1305, 1.0
        %v1355 = vlog2.pop %v1354
        %v1356 = vmul.f32 %v1355, 0.6931472
        %v1357 = vmul.f32 -0.5, %v1305
        %v1358 = vadd.f32 %v1357, 1.0
        %v1359 = vmul.f32 %v1358, %v1305
        %v1360 = vand.u32 2147483647, %v1305
        %vm1361 = vcmp.lt.f32.partialorder %v1360, 0.0004427343
        %v1362 = vsel %vm1361, %v1359, %v1356
        %v1363 = vadd.f32 %v1307, 1.0
        %v1364 = vlog2.pop %v1363
        %v1365 = vmul.f32 %v1364, 0.6931472
        %v1366 = vmul.f32 -0.5, %v1307
        %v1367 = vadd.f32 %v1366, 1.0
        %v1368 = vmul.f32 %v1367, %v1307
        %v1369 = vand.u32 2147483647, %v1307
        %vm1370 = vcmp.lt.f32.partialorder %v1369, 0.0004427343
        %v1371 = vsel %vm1370, %v1368, %v1365
        %v1372 = vsub.f32 %v1332, %v1344
        %v1373 = vsub.f32 %v1333, %v1353
        %v1374 = vsub.f32 %v1334, %v1362
        %v1375 = vsub.f32 %v1335, %v1371
        %v1376 = vld [vmem:[%s314] sm:$0xff]
        %v1377 = vld [vmem:[%s314 + $0x8] sm:$0xff]
        %v1378 = vunpack.c.l.bf16 %v1376
        %v1379 = vunpack.c.h.bf16 %v1376
        %v1380 = vunpack.c.l.bf16 %v1377
        %v1381 = vunpack.c.h.bf16 %v1377
        %v1382 = vrsqrt.pop %v1328
        %v1383 = vmul.f32 %v1328, %v1382
        %vm1384 = vcmp.eq.f32.partialorder %v1328, inf
        %v1385 = vsel %vm1384, %v1328, %v1383
        %vm1386 = vcmp.eq.f32.partialorder %v1328, 0.0
        %v1387 = vand.u32 %v1328, 2147483648
        %v1388 = vsel %vm1386, %v1387, %v1385
        %v1389 = vrsqrt.pop %v1329
        %v1390 = vmul.f32 %v1329, %v1389
        %vm1391 = vcmp.eq.f32.partialorder %v1329, inf
        %v1392 = vsel %vm1391, %v1329, %v1390
        %vm1393 = vcmp.eq.f32.partialorder %v1329, 0.0
        %v1394 = vand.u32 %v1329, 2147483648
        %v1395 = vsel %vm1393, %v1394, %v1392
        %v1396 = vrsqrt.pop %v1330
        %v1397 = vmul.f32 %v1330, %v1396
        %vm1398 = vcmp.eq.f32.partialorder %v1330, inf
        %v1399 = vsel %vm1398, %v1330, %v1397
        %vm1400 = vcmp.eq.f32.partialorder %v1330, 0.0
        %v1401 = vand.u32 %v1330, 2147483648
        %v1402 = vsel %vm1400, %v1401, %v1399
        %v1403 = vrsqrt.pop %v1331
        %v1404 = vmul.f32 %v1331, %v1403
        %vm1405 = vcmp.eq.f32.partialorder %v1331, inf
        %v1406 = vsel %vm1405, %v1331, %v1404
        %vm1407 = vcmp.eq.f32.partialorder %v1331, 0.0
        %v1408 = vand.u32 %v1331, 2147483648
        %v1409 = vsel %vm1407, %v1408, %v1406
        %v1410 = vmul.f32 %v1388, %v1378
        %v1411 = vmul.f32 %v1395, %v1379
        %v1412 = vmul.f32 %v1402, %v1380
        %v1413 = vmul.f32 %v1409, %v1381
        %v1414 = vadd.f32 %v1285, %v1410
        %v1415 = vadd.f32 %v1287, %v1411
        %v1416 = vadd.f32 %v1289, %v1412
        %v1417 = vadd.f32 %v1291, %v1413
        %v1418 = vmax.f32 %v1414, 0.0
        %v1419 = vmax.f32 %v1415, 0.0
        %v1420 = vmax.f32 %v1416, 0.0
        %v1421 = vmax.f32 %v1417, 0.0
        %1422 = vst [vmem:[%s302] sm:$0xff] %v1418
        %1423 = vst [vmem:[%s302 + $0x8] sm:$0xff] %v1419
        %1424 = vst [vmem:[%s302 + $0x10] sm:$0xff] %v1420
        %1425 = vst [vmem:[%s302 + $0x18] sm:$0xff] %v1421
        %v1426 = vmul.f32 %v1285, %v1285
        %v1427 = vmul.f32 %v1287, %v1287
        %v1428 = vmul.f32 %v1289, %v1289
        %v1429 = vmul.f32 %v1291, %v1291
        %v1430 = vadd.f32 %v1328, %v1426
        %v1431 = vadd.f32 %v1329, %v1427
        %v1432 = vadd.f32 %v1330, %v1428
        %v1433 = vadd.f32 %v1331, %v1429
        %v1434 = vsub.f32 %v1430, %v1372
        %v1435 = vsub.f32 %v1431, %v1373
        %v1436 = vsub.f32 %v1432, %v1374
        %v1437 = vsub.f32 %v1433, %v1375
        %v1438 = vsub.f32 %v1434, 1.0
        %v1439 = vsub.f32 %v1435, 1.0
        %v1440 = vsub.f32 %v1436, 1.0
        %v1441 = vsub.f32 %v1437, 1.0
        %v1442 = vrot.slane %v1438, 4
        %v1443 = vadd.f32 %v1438, %v1442
        %v1444 = vrot.slane %v1443, 2
        %v1445 = vadd.f32 %v1443, %v1444
        %v1446 = vrot.slane %v1445, 1
        %v1447 = vadd.f32 %v1445, %v1446
        %v1448 = vrot.slane %v1439, 4
        %v1449 = vadd.f32 %v1439, %v1448
        %v1450 = vrot.slane %v1449, 2
        %v1451 = vadd.f32 %v1449, %v1450
        %v1452 = vrot.slane %v1451, 1
        %v1453 = vadd.f32 %v1451, %v1452
        %v1454 = vrot.slane %v1440, 4
        %v1455 = vadd.f32 %v1440, %v1454
        %v1456 = vrot.slane %v1455, 2
        %v1457 = vadd.f32 %v1455, %v1456
        %v1458 = vrot.slane %v1457, 1
        %v1459 = vadd.f32 %v1457, %v1458
        %v1460 = vrot.slane %v1441, 4
        %v1461 = vadd.f32 %v1441, %v1460
        %v1462 = vrot.slane %v1461, 2
        %v1463 = vadd.f32 %v1461, %v1462
        %v1464 = vrot.slane %v1463, 1
        %v1465 = vadd.f32 %v1463, %v1464
        %v1470 = vcombine.low %v1447, %v1453
        %v1471 = vcombine.low %v1459, %v1465
        %v1473 = vunpack.c.l.s4 1966171168
        %v1474 = vunpack.c.0.s8 %v1473
        %v1475 = vlaneseq
        %v1476 = vshrl.u32 %v1475, 7
        %v1477 = vsub.s32 %v1474, %v1476
        %v1478 = vrot.slane %v1470, %v1477
        %v1480 = vunpack.c.l.s4 1966171168
        %v1481 = vunpack.c.0.s8 %v1480
        %v1482 = vlaneseq
        %v1483 = vshrl.u32 %v1482, 7
        %v1484 = vsub.s32 %v1481, %v1483
        %v1485 = vrot.slane %v1471, %v1484
        %v1486 = vcombine.low %v1478, %v1485
        %v1488 = vunpack.c.l.s4 1966171168
        %v1489 = vunpack.c.0.s8 %v1488
        %v1490 = vlaneseq
        %v1491 = vshrl.u32 %v1490, 7
        %v1492 = vsub.s32 %v1489, %v1491
        %v1493 = vrot.slane %v1486, %v1492
        %v1495 = vlaneseq
        %vm1496 = vcmp.ge.s32.totalorder %v1495, 0
        %vm1497 = vcmp.lt.s32.totalorder %v1495, 512
        %vm1498 = vmand %vm1496, %vm1497
        %1499 = vst.msk [vmem:[%s309] sm:$0xf] %vm1498, %v1493
        %s1500 = sand.u32 %s166, 1
        %s1501 = scalar_lea.sflag [#allocation5], %s1500
        %s1502 = sand.u32 %s166, 1
        %s1503 = smul.addr %s1502, 32
        %s1504 = scalar_lea.vmem [#allocation8], %s1503
        %s1505 = sand.u32 %s192, 1
        %s1506 = scalar_lea.sflag [#allocation10], %s1505
        %s1507 = sand.u32 %s192, 1
        %s1508 = smul.addr %s1507, 4
        %s1509 = scalar_lea.vmem [#allocation9], %s1508
        // Predicated region
        $region53: #{tpu_custom_call.1} parent=43 // pred_check
          %p1510 = pneg %p176
        $region54: #{tpu_custom_call.1} parent=43 // pred_check_branch
          %1512 = sbr.rel (%p1510) target = $region56
        $region55: #{tpu_custom_call.1} parent=43 // pred_region
          %s1513 = smul.u32 4, %s27
          %s1515 = ssub.s32 512, 512
          %1516 = vsyncadd %s1501, %s1515
          %s1517 = smul.addr %s1513, 128
          %s1518 = scalar_lea.hbm %s6, %s1517
          %s1520 = sshll.u32 %s1504, 4
          %s1521 = int_to_ptr.vmem [resolvable:$true] %s1520
          %1523 = dma.vmem_to_hbm [thread:$0]  %s1521, 512, %s1518, %s1501
        $region56: #{tpu_custom_call.1} parent=43 // pred_fallthru
          _
        // Predicated region
        $region57: #{tpu_custom_call.1} parent=43 // pred_check
          %p1524 = pneg %p202
        $region58: #{tpu_custom_call.1} parent=43 // pred_check_branch
          %1526 = sbr.rel (%p1524) target = $region60
        $region59: #{tpu_custom_call.1} parent=43 // pred_region
          %s1527 = smul.u32 4, %s27
          %s1529 = ssub.s32 64, 64
          %1530 = vsyncadd %s1506, %s1529
          %s1531 = smul.addr %s1527, 16
          %s1532 = scalar_lea.hbm %s7, %s1531
          %s1534 = sshll.u32 %s1509, 4
          %s1535 = int_to_ptr.vmem [resolvable:$true] %s1534
          %1537 = dma.vmem_to_hbm [thread:$0]  %s1535, 64, %s1532, %s1506
        $region60: #{tpu_custom_call.1} parent=43 // pred_fallthru
          _
      $region44: #{tpu_custom_call.1} parent=5 // pred_fallthru
        _
      %p1538 = scmp.le.s32.totalorder 2, %s22
      // Predicated region
      $region61: #{tpu_custom_call.1} parent=5 // pred_check
        %p1539 = pneg %p1538
      $region62: #{tpu_custom_call.1} parent=5 // pred_check_branch
        %1541 = sbr.rel (%p1539) target = $region64
      $region63: #{tpu_custom_call.1} parent=5 // pred_region
        %s1542 = ssub.s32 %s22, 2
        // Predicated region
        $region65: #{tpu_custom_call.1} parent=63 // pred_check
          %p1543 = pneg %p182
        $region66: #{tpu_custom_call.1} parent=63 // pred_check_branch
          %1545 = sbr.rel (%p1543) target = $region68
        $region67: #{tpu_custom_call.1} parent=63 // pred_region
          %s1546 = sand.u32 %s167, 1
          %s1547 = scalar_lea.sflag [#allocation5], %s1546
          %s1548 = sand.u32 %s167, 1
          %s1549 = smul.addr %s1548, 32
          %s1550 = scalar_lea.vmem [#allocation8], %s1549
          %1551 = dma.done %s1547, 512
        $region68: #{tpu_custom_call.1} parent=63 // pred_fallthru
          _
        // Predicated region
        $region69: #{tpu_custom_call.1} parent=63 // pred_check
          %p1552 = pneg %p208
        $region70: #{tpu_custom_call.1} parent=63 // pred_check_branch
          %1554 = sbr.rel (%p1552) target = $region72
        $region71: #{tpu_custom_call.1} parent=63 // pred_region
          %s1555 = sand.u32 %s193, 1
          %s1556 = scalar_lea.sflag [#allocation10], %s1555
          %s1557 = sand.u32 %s193, 1
          %s1558 = smul.addr %s1557, 4
          %s1559 = scalar_lea.vmem [#allocation9], %s1558
          %1560 = dma.done %s1556, 64
        $region72: #{tpu_custom_call.1} parent=63 // pred_fallthru
          _
      $region64: #{tpu_custom_call.1} parent=5 // pred_fallthru
        _
    $region6: #{tpu_custom_call.1} parent=1 // loop_footer
      %s26 = sadd.s32 1, %s22
    $region7: #{tpu_custom_call.1} parent=1 // loop_footer_branch
      %21 = sbr.rel target = $region3
    $region8: #{tpu_custom_call.1} parent=1 // loop_exit
      _
    %1561 = vsyncpa [#allocation4], 1
    %s1562 = scalar_lea.sflag [#allocation4], 1
    %1563 = vsyncpa %s1562, 1
    %1564 = vsyncpa [#allocation7], 1
    %1565 = vsyncpa [#allocation5], 1
    %s1566 = scalar_lea.sflag [#allocation5], 1
    %1567 = vsyncpa %s1566, 1
    %1568 = vsyncpa [#allocation10], 1
    %s1569 = scalar_lea.sflag [#allocation10], 1
    %1570 = vsyncpa %s1569, 1

</llo_original>
